<compile_context>
chip_gen: v7x
topology: tpu7x:2x2x1
jax: 0.10.0
libtpu: 0.0.40
codegen_flags: <defaults>
</compile_context>

<pallas_src>
import functools

import jax
import jax.numpy as jnp
from jax import lax
from jax.experimental import pallas as pl
from jax.experimental.pallas import tpu as pltpu


def _round_up(x, m):
    return (x + m - 1) // m * m


def lstm_fc_kernel(xg_ref, whh_ref, wfc_ref, bfc_ref, out_ref, h_sc, c_sc,
                   *, hidden_pad, seq_len):
    """Single grid step: full LSTM recurrence (fori_loop over time) + final FC.

    xg_ref  : (S, Bp, 4*Hp) f32   precomputed x_t @ W_ih^T + (b_ih + b_hh)
    whh_ref : (Hp, 4*Hp)    bf16  hidden->gates weight (transposed, per-gate lane-padded)
    wfc_ref : (Hp, Op)      bf16  final linear weight (transposed, padded)
    bfc_ref : (1, Op)       f32   final linear bias (padded)
    out_ref : (Bp, Op)      f32   fc(h_final)
    h_sc/c_sc : (Bp, Hp)    f32   state scratch
    """
    Hp = hidden_pad
    h_sc[...] = jnp.zeros_like(h_sc)
    c_sc[...] = jnp.zeros_like(c_sc)

    def step(t, carry):
        # Only the recurrent projection stays in the serial loop: one MXU push,
        # bf16 inputs, f32 accumulation.
        gates = xg_ref[t] + jnp.dot(
            h_sc[...].astype(jnp.bfloat16), whh_ref[...],
            preferred_element_type=jnp.float32)               # (Bp, 4*Hp) f32

        # Lane-aligned 128-wide gate slices; PyTorch gate order: i, f, g, o.
        i_g = jax.nn.sigmoid(gates[:, 0 * Hp:1 * Hp])
        f_g = jax.nn.sigmoid(gates[:, 1 * Hp:2 * Hp])
        g_g = jnp.tanh(gates[:, 2 * Hp:3 * Hp])
        o_g = jax.nn.sigmoid(gates[:, 3 * Hp:4 * Hp])

        c_new = f_g * c_sc[...] + i_g * g_g
        h_new = o_g * jnp.tanh(c_new)
        c_sc[...] = c_new
        h_sc[...] = h_new
        return carry

    lax.fori_loop(0, seq_len, step, 0, unroll=True)

    # Final FC on the last hidden state (runs once).
    out_ref[...] = (jnp.dot(h_sc[...].astype(jnp.bfloat16), wfc_ref[...],
                            preferred_element_type=jnp.float32)
                    + bfc_ref[...]).astype(out_ref.dtype)


def rnn_forward(tokens, params):
    """Embedding + input projection as wrapper glue; serial LSTM + FC in Pallas."""
    emb = params["embedding"]                      # (V, H)
    w_ih = params["w_ih"]                          # (4H, H)
    w_hh = params["w_hh"]                          # (4H, H)
    b = params["b_ih"] + params["b_hh"]            # (4H,)
    w_fc = params["w_fc"]                          # (O, H)
    b_fc = params["b_fc"]                          # (O,)

    seq_len, batch = tokens.shape
    H = emb.shape[1]
    O = w_fc.shape[0]

    Hp = _round_up(H, 128)      # lane-aligned per-gate blocks
    Op = _round_up(O, 128)      # lane-dense output store
    Bp = _round_up(batch, 8)    # sublane-aligned batch

    # ---------------- glue / layout prep (outside the serial recurrence) -------------
    x = jnp.take(emb, tokens, axis=0)                        # (S, B, H)
    x = jnp.pad(x, ((0, 0), (0, Bp - batch), (0, Hp - H)))   # (S, Bp, Hp)

    def gate_pad_t(w):
        # (4H, H) PyTorch layout -> (Hp, 4*Hp): transposed, each gate block padded
        # to a 128-lane boundary so in-kernel gate slices are free views.
        w4 = jnp.transpose(w.reshape(4, H, H), (0, 2, 1))    # (gate, in, out)
        w4 = jnp.pad(w4, ((0, 0), (0, Hp - H), (0, Hp - H))) # (gate, Hp, Hp)
        return jnp.transpose(w4, (1, 0, 2)).reshape(Hp, 4 * Hp)

    w_ih_t = gate_pad_t(w_ih)                                 # (Hp, 4Hp) f32
    w_hh_t = gate_pad_t(w_hh).astype(jnp.bfloat16)            # (Hp, 4Hp) bf16
    b_pad = jnp.pad(b.reshape(4, H), ((0, 0), (0, Hp - H))).reshape(4 * Hp)

    w_fc_t = jnp.pad(w_fc.T, ((0, Hp - H), (0, Op - O))).astype(jnp.bfloat16)
    b_fc_p = jnp.pad(b_fc, (0, Op - O))[None, :]              # (1, Op) f32

    # Hoisted input projection: one big matmul over the whole sequence, bias folded in.
    xg = jnp.einsum("sbh,hg->sbg", x, w_ih_t,
                    preferred_element_type=jnp.float32) + b_pad[None, None, :]

    kernel = functools.partial(lstm_fc_kernel, hidden_pad=Hp, seq_len=seq_len)

    out = pl.pallas_call(
        kernel,
        out_shape=jax.ShapeDtypeStruct((Bp, Op), jnp.float32),
        grid_spec=pltpu.PrefetchScalarGridSpec(
            num_scalar_prefetch=0,
            grid=(1,),                                          # single step: no per-timestep grid overhead
            in_specs=[
                pl.BlockSpec((seq_len, Bp, 4 * Hp), lambda i: (0, 0, 0)),  # pre-activations
                pl.BlockSpec((Hp, 4 * Hp), lambda i: (0, 0)),              # W_hh^T (bf16)
                pl.BlockSpec((Hp, Op), lambda i: (0, 0)),                  # W_fc^T (bf16)
                pl.BlockSpec((1, Op), lambda i: (0, 0)),                   # b_fc
            ],
            out_specs=pl.BlockSpec((Bp, Op), lambda i: (0, 0)),
            scratch_shapes=[
                pltpu.VMEM((Bp, Hp), jnp.float32),  # h
                pltpu.VMEM((Bp, Hp), jnp.float32),  # c
            ],
        ),
        compiler_params=pltpu.CompilerParams(
            dimension_semantics=("arbitrary",)),
    )(xg, w_hh_t, w_fc_t, b_fc_p)

    return out[:batch, :O]


def init_params(key, input_size, hidden_size, output_size):
    """Deterministic init matching the PyTorch module's parameter shapes."""
    k = jax.random.split(key, 7)
    bound = 1.0 / jnp.sqrt(hidden_size)
    return {
        # nn.Embedding: N(0, 1)
        "embedding": jax.random.normal(k[0], (input_size, hidden_size),
                                       jnp.float32),
        # nn.LSTM: U(-1/sqrt(H), 1/sqrt(H))
        "w_ih": jax.random.uniform(k[1], (4 * hidden_size, hidden_size),
                                   jnp.float32, -bound, bound),
        "w_hh": jax.random.uniform(k[2], (4 * hidden_size, hidden_size),
                                   jnp.float32, -bound, bound),
        "b_ih": jax.random.uniform(k[3], (4 * hidden_size,),
                                   jnp.float32, -bound, bound),
        "b_hh": jax.random.uniform(k[4], (4 * hidden_size,),
                                   jnp.float32, -bound, bound),
        # nn.Linear: U(-1/sqrt(H), 1/sqrt(H))
        "w_fc": jax.random.uniform(k[5], (output_size, hidden_size),
                                   jnp.float32, -bound, bound),
        "b_fc": jax.random.uniform(k[6], (output_size,),
                                   jnp.float32, -bound, bound),
    }


if __name__ == "__main__":
    input_size = 16    # vocab
    hidden_size = 32
    output_size = 16
    seq_len = 8
    batch = 2

    key = jax.random.PRNGKey(0)
    pkey, tkey = jax.random.split(key)
    params = init_params(pkey, input_size, hidden_size, output_size)
    tokens = jax.random.randint(tkey, (seq_len, batch), 0, input_size,
                                dtype=jnp.int32)

    out = rnn_forward(tokens, params)
    out = jax.block_until_ready(out)
    assert out.shape == (batch, output_size)
    assert bool(jnp.all(jnp.isfinite(out)))
    print("KERNEL_OK")
</pallas_src>

<mosaic_0001>
module attributes {stable_mosaic.version = 11 : i64} {
  func.func @lstm_fc_kernel(%arg0: i32, %arg1: memref<8x8x512xf32, #tpu.memory_space<vmem>>, %arg2: memref<128x512xbf16, #tpu.memory_space<vmem>>, %arg3: memref<128x128xbf16, #tpu.memory_space<vmem>>, %arg4: memref<1x128xf32, #tpu.memory_space<vmem>>, %arg5: memref<8x128xf32, #tpu.memory_space<vmem>>, %arg6: memref<8x128xf32, #tpu.memory_space<vmem>>, %arg7: memref<8x128xf32, #tpu.memory_space<vmem>>) attributes {dimension_semantics = [#tpu.dimension_semantics<arbitrary>], iteration_bounds = array<i64: 1>, scalar_prefetch = 0 : i64, scratch_operands = 2 : i64, tpu.core_type = #tpu.core_type<tc>, window_params = [{pipeline_mode = #tpu.pipeline_mode<synchronous>, transform_indices = @transform_0, window_bounds = array<i64: 8, 8, 512>}, {pipeline_mode = #tpu.pipeline_mode<synchronous>, transform_indices = @transform_1, window_bounds = array<i64: 128, 512>}, {pipeline_mode = #tpu.pipeline_mode<synchronous>, transform_indices = @transform_2, window_bounds = array<i64: 128, 128>}, {pipeline_mode = #tpu.pipeline_mode<synchronous>, transform_indices = @transform_3, window_bounds = array<i64: 1, 128>}, {pipeline_mode = #tpu.pipeline_mode<synchronous>, transform_indices = @transform_4, window_bounds = array<i64: 8, 128>}]} {
    %cst = arith.constant 0.000000e+00 : f32
    %0 = vector.broadcast %cst : f32 to vector<8x128xf32>
    %c0 = arith.constant 0 : index
    %c0_0 = arith.constant 0 : index
    %1 = vector.load %arg6[%c0, %c0_0] : memref<8x128xf32, #tpu.memory_space<vmem>>, vector<8x128xf32>
    tpu.vector_store %arg6[%c0, %c0_0], %0 {strides = array<i32>} : memref<8x128xf32, #tpu.memory_space<vmem>>, vector<8x128xf32>,
    %cst_1 = arith.constant 0.000000e+00 : f32
    %2 = vector.broadcast %cst_1 : f32 to vector<8x128xf32>
    %c0_2 = arith.constant 0 : index
    %c0_3 = arith.constant 0 : index
    %3 = vector.load %arg7[%c0_2, %c0_3] : memref<8x128xf32, #tpu.memory_space<vmem>>, vector<8x128xf32>
    tpu.vector_store %arg7[%c0_2, %c0_3], %2 {strides = array<i32>} : memref<8x128xf32, #tpu.memory_space<vmem>>, vector<8x128xf32>,
    %c0_i32 = arith.constant 0 : i32
    %4 = arith.index_cast %c0_i32 : i32 to index
    %c0_4 = arith.constant 0 : index
    %c0_5 = arith.constant 0 : index
    %5 = vector.load %arg1[%4, %c0_4, %c0_5] : memref<8x8x512xf32, #tpu.memory_space<vmem>>, vector<1x8x512xf32>
    %6 = vector.shape_cast %5 : vector<1x8x512xf32> to vector<8x512xf32>
    %c0_6 = arith.constant 0 : index
    %c0_7 = arith.constant 0 : index
    %7 = vector.load %arg6[%c0_6, %c0_7] : memref<8x128xf32, #tpu.memory_space<vmem>>, vector<8x128xf32>
    %8 = arith.truncf %7 : vector<8x128xf32> to vector<8x128xbf16>
    %c0_8 = arith.constant 0 : index
    %c0_9 = arith.constant 0 : index
    %9 = vector.load %arg2[%c0_8, %c0_9] : memref<128x512xbf16, #tpu.memory_space<vmem>>, vector<128x512xbf16>
    %cst_10 = arith.constant dense<0.000000e+00> : vector<8x512xf32>
    %10 = tpu.matmul %8, %9, %cst_10 {dimension_numbers = #tpu.dot_dimension_numbers<[1], [0], [0], [1], [0, 0, 1, 1], [], []>} : vector<8x128xbf16>, vector<128x512xbf16>, vector<8x512xf32> -> vector<8x512xf32>
    %11 = arith.addf %6, %10 : vector<8x512xf32>
    %12 = vector.extract_strided_slice %11 {offsets = [0, 0], sizes = [8, 128], strides = [1, 1]} : vector<8x512xf32> to vector<8x128xf32>
    %13 = arith.negf %12 : vector<8x128xf32>
    %14 = math.exp %13 : vector<8x128xf32>
    %cst_11 = arith.constant 1.000000e+00 : f32
    %15 = vector.broadcast %cst_11 : f32 to vector<8x128xf32>
    %16 = arith.addf %15, %14 : vector<8x128xf32>
    %17 = arith.divf %15, %16 : vector<8x128xf32>
    %18 = vector.extract_strided_slice %11 {offsets = [0, 128], sizes = [8, 128], strides = [1, 1]} : vector<8x512xf32> to vector<8x128xf32>
    %19 = arith.negf %18 : vector<8x128xf32>
    %20 = math.exp %19 : vector<8x128xf32>
    %cst_12 = arith.constant 1.000000e+00 : f32
    %21 = vector.broadcast %cst_12 : f32 to vector<8x128xf32>
    %22 = arith.addf %21, %20 : vector<8x128xf32>
    %23 = arith.divf %21, %22 : vector<8x128xf32>
    %24 = vector.extract_strided_slice %11 {offsets = [0, 256], sizes = [8, 128], strides = [1, 1]} : vector<8x512xf32> to vector<8x128xf32>
    %25 = math.tanh %24 : vector<8x128xf32>
    %26 = vector.extract_strided_slice %11 {offsets = [0, 384], sizes = [8, 128], strides = [1, 1]} : vector<8x512xf32> to vector<8x128xf32>
    %27 = arith.negf %26 : vector<8x128xf32>
    %28 = math.exp %27 : vector<8x128xf32>
    %cst_13 = arith.constant 1.000000e+00 : f32
    %29 = vector.broadcast %cst_13 : f32 to vector<8x128xf32>
    %30 = arith.addf %29, %28 : vector<8x128xf32>
    %31 = arith.divf %29, %30 : vector<8x128xf32>
    %c0_14 = arith.constant 0 : index
    %c0_15 = arith.constant 0 : index
    %32 = vector.load %arg7[%c0_14, %c0_15] : memref<8x128xf32, #tpu.memory_space<vmem>>, vector<8x128xf32>
    %33 = arith.mulf %23, %32 : vector<8x128xf32>
    %34 = arith.mulf %17, %25 : vector<8x128xf32>
    %35 = arith.addf %33, %34 : vector<8x128xf32>
    %36 = math.tanh %35 : vector<8x128xf32>
    %37 = arith.mulf %31, %36 : vector<8x128xf32>
    %c0_16 = arith.constant 0 : index
    %c0_17 = arith.constant 0 : index
    %38 = vector.load %arg7[%c0_16, %c0_17] : memref<8x128xf32, #tpu.memory_space<vmem>>, vector<8x128xf32>
    tpu.vector_store %arg7[%c0_16, %c0_17], %35 {strides = array<i32>} : memref<8x128xf32, #tpu.memory_space<vmem>>, vector<8x128xf32>,
    %c0_18 = arith.constant 0 : index
    %c0_19 = arith.constant 0 : index
    %39 = vector.load %arg6[%c0_18, %c0_19] : memref<8x128xf32, #tpu.memory_space<vmem>>, vector<8x128xf32>
    tpu.vector_store %arg6[%c0_18, %c0_19], %37 {strides = array<i32>} : memref<8x128xf32, #tpu.memory_space<vmem>>, vector<8x128xf32>,
    %c1_i32 = arith.constant 1 : i32
    %40 = arith.index_cast %c1_i32 : i32 to index
    %c0_20 = arith.constant 0 : index
    %c0_21 = arith.constant 0 : index
    %41 = vector.load %arg1[%40, %c0_20, %c0_21] : memref<8x8x512xf32, #tpu.memory_space<vmem>>, vector<1x8x512xf32>
    %42 = vector.shape_cast %41 : vector<1x8x512xf32> to vector<8x512xf32>
    %c0_22 = arith.constant 0 : index
    %c0_23 = arith.constant 0 : index
    %43 = vector.load %arg6[%c0_22, %c0_23] : memref<8x128xf32, #tpu.memory_space<vmem>>, vector<8x128xf32>
    %44 = arith.truncf %43 : vector<8x128xf32> to vector<8x128xbf16>
    %c0_24 = arith.constant 0 : index
    %c0_25 = arith.constant 0 : index
    %45 = vector.load %arg2[%c0_24, %c0_25] : memref<128x512xbf16, #tpu.memory_space<vmem>>, vector<128x512xbf16>
    %cst_26 = arith.constant dense<0.000000e+00> : vector<8x512xf32>
    %46 = tpu.matmul %44, %45, %cst_26 {dimension_numbers = #tpu.dot_dimension_numbers<[1], [0], [0], [1], [0, 0, 1, 1], [], []>} : vector<8x128xbf16>, vector<128x512xbf16>, vector<8x512xf32> -> vector<8x512xf32>
    %47 = arith.addf %42, %46 : vector<8x512xf32>
    %48 = vector.extract_strided_slice %47 {offsets = [0, 0], sizes = [8, 128], strides = [1, 1]} : vector<8x512xf32> to vector<8x128xf32>
    %49 = arith.negf %48 : vector<8x128xf32>
    %50 = math.exp %49 : vector<8x128xf32>
    %cst_27 = arith.constant 1.000000e+00 : f32
    %51 = vector.broadcast %cst_27 : f32 to vector<8x128xf32>
    %52 = arith.addf %51, %50 : vector<8x128xf32>
    %53 = arith.divf %51, %52 : vector<8x128xf32>
    %54 = vector.extract_strided_slice %47 {offsets = [0, 128], sizes = [8, 128], strides = [1, 1]} : vector<8x512xf32> to vector<8x128xf32>
    %55 = arith.negf %54 : vector<8x128xf32>
    %56 = math.exp %55 : vector<8x128xf32>
    %cst_28 = arith.constant 1.000000e+00 : f32
    %57 = vector.broadcast %cst_28 : f32 to vector<8x128xf32>
    %58 = arith.addf %57, %56 : vector<8x128xf32>
    %59 = arith.divf %57, %58 : vector<8x128xf32>
    %60 = vector.extract_strided_slice %47 {offsets = [0, 256], sizes = [8, 128], strides = [1, 1]} : vector<8x512xf32> to vector<8x128xf32>
    %61 = math.tanh %60 : vector<8x128xf32>
    %62 = vector.extract_strided_slice %47 {offsets = [0, 384], sizes = [8, 128], strides = [1, 1]} : vector<8x512xf32> to vector<8x128xf32>
    %63 = arith.negf %62 : vector<8x128xf32>
    %64 = math.exp %63 : vector<8x128xf32>
    %cst_29 = arith.constant 1.000000e+00 : f32
    %65 = vector.broadcast %cst_29 : f32 to vector<8x128xf32>
    %66 = arith.addf %65, %64 : vector<8x128xf32>
    %67 = arith.divf %65, %66 : vector<8x128xf32>
    %c0_30 = arith.constant 0 : index
    %c0_31 = arith.constant 0 : index
    %68 = vector.load %arg7[%c0_30, %c0_31] : memref<8x128xf32, #tpu.memory_space<vmem>>, vector<8x128xf32>
    %69 = arith.mulf %59, %68 : vector<8x128xf32>
    %70 = arith.mulf %53, %61 : vector<8x128xf32>
    %71 = arith.addf %69, %70 : vector<8x128xf32>
    %72 = math.tanh %71 : vector<8x128xf32>
    %73 = arith.mulf %67, %72 : vector<8x128xf32>
    %c0_32 = arith.constant 0 : index
    %c0_33 = arith.constant 0 : index
    %74 = vector.load %arg7[%c0_32, %c0_33] : memref<8x128xf32, #tpu.memory_space<vmem>>, vector<8x128xf32>
    tpu.vector_store %arg7[%c0_32, %c0_33], %71 {strides = array<i32>} : memref<8x128xf32, #tpu.memory_space<vmem>>, vector<8x128xf32>,
    %c0_34 = arith.constant 0 : index
    %c0_35 = arith.constant 0 : index
    %75 = vector.load %arg6[%c0_34, %c0_35] : memref<8x128xf32, #tpu.memory_space<vmem>>, vector<8x128xf32>
    tpu.vector_store %arg6[%c0_34, %c0_35], %73 {strides = array<i32>} : memref<8x128xf32, #tpu.memory_space<vmem>>, vector<8x128xf32>,
    %c2_i32 = arith.constant 2 : i32
    %76 = arith.index_cast %c2_i32 : i32 to index
    %c0_36 = arith.constant 0 : index
    %c0_37 = arith.constant 0 : index
    %77 = vector.load %arg1[%76, %c0_36, %c0_37] : memref<8x8x512xf32, #tpu.memory_space<vmem>>, vector<1x8x512xf32>
    %78 = vector.shape_cast %77 : vector<1x8x512xf32> to vector<8x512xf32>
    %c0_38 = arith.constant 0 : index
    %c0_39 = arith.constant 0 : index
    %79 = vector.load %arg6[%c0_38, %c0_39] : memref<8x128xf32, #tpu.memory_space<vmem>>, vector<8x128xf32>
    %80 = arith.truncf %79 : vector<8x128xf32> to vector<8x128xbf16>
    %c0_40 = arith.constant 0 : index
    %c0_41 = arith.constant 0 : index
    %81 = vector.load %arg2[%c0_40, %c0_41] : memref<128x512xbf16, #tpu.memory_space<vmem>>, vector<128x512xbf16>
    %cst_42 = arith.constant dense<0.000000e+00> : vector<8x512xf32>
    %82 = tpu.matmul %80, %81, %cst_42 {dimension_numbers = #tpu.dot_dimension_numbers<[1], [0], [0], [1], [0, 0, 1, 1], [], []>} : vector<8x128xbf16>, vector<128x512xbf16>, vector<8x512xf32> -> vector<8x512xf32>
    %83 = arith.addf %78, %82 : vector<8x512xf32>
    %84 = vector.extract_strided_slice %83 {offsets = [0, 0], sizes = [8, 128], strides = [1, 1]} : vector<8x512xf32> to vector<8x128xf32>
    %85 = arith.negf %84 : vector<8x128xf32>
    %86 = math.exp %85 : vector<8x128xf32>
    %cst_43 = arith.constant 1.000000e+00 : f32
    %87 = vector.broadcast %cst_43 : f32 to vector<8x128xf32>
    %88 = arith.addf %87, %86 : vector<8x128xf32>
    %89 = arith.divf %87, %88 : vector<8x128xf32>
    %90 = vector.extract_strided_slice %83 {offsets = [0, 128], sizes = [8, 128], strides = [1, 1]} : vector<8x512xf32> to vector<8x128xf32>
    %91 = arith.negf %90 : vector<8x128xf32>
    %92 = math.exp %91 : vector<8x128xf32>
    %cst_44 = arith.constant 1.000000e+00 : f32
    %93 = vector.broadcast %cst_44 : f32 to vector<8x128xf32>
    %94 = arith.addf %93, %92 : vector<8x128xf32>
    %95 = arith.divf %93, %94 : vector<8x128xf32>
    %96 = vector.extract_strided_slice %83 {offsets = [0, 256], sizes = [8, 128], strides = [1, 1]} : vector<8x512xf32> to vector<8x128xf32>
    %97 = math.tanh %96 : vector<8x128xf32>
    %98 = vector.extract_strided_slice %83 {offsets = [0, 384], sizes = [8, 128], strides = [1, 1]} : vector<8x512xf32> to vector<8x128xf32>
    %99 = arith.negf %98 : vector<8x128xf32>
    %100 = math.exp %99 : vector<8x128xf32>
    %cst_45 = arith.constant 1.000000e+00 : f32
    %101 = vector.broadcast %cst_45 : f32 to vector<8x128xf32>
    %102 = arith.addf %101, %100 : vector<8x128xf32>
    %103 = arith.divf %101, %102 : vector<8x128xf32>
    %c0_46 = arith.constant 0 : index
    %c0_47 = arith.constant 0 : index
    %104 = vector.load %arg7[%c0_46, %c0_47] : memref<8x128xf32, #tpu.memory_space<vmem>>, vector<8x128xf32>
    %105 = arith.mulf %95, %104 : vector<8x128xf32>
    %106 = arith.mulf %89, %97 : vector<8x128xf32>
    %107 = arith.addf %105, %106 : vector<8x128xf32>
    %108 = math.tanh %107 : vector<8x128xf32>
    %109 = arith.mulf %103, %108 : vector<8x128xf32>
    %c0_48 = arith.constant 0 : index
    %c0_49 = arith.constant 0 : index
    %110 = vector.load %arg7[%c0_48, %c0_49] : memref<8x128xf32, #tpu.memory_space<vmem>>, vector<8x128xf32>
    tpu.vector_store %arg7[%c0_48, %c0_49], %107 {strides = array<i32>} : memref<8x128xf32, #tpu.memory_space<vmem>>, vector<8x128xf32>,
    %c0_50 = arith.constant 0 : index
    %c0_51 = arith.constant 0 : index
    %111 = vector.load %arg6[%c0_50, %c0_51] : memref<8x128xf32, #tpu.memory_space<vmem>>, vector<8x128xf32>
    tpu.vector_store %arg6[%c0_50, %c0_51], %109 {strides = array<i32>} : memref<8x128xf32, #tpu.memory_space<vmem>>, vector<8x128xf32>,
    %c3_i32 = arith.constant 3 : i32
    %112 = arith.index_cast %c3_i32 : i32 to index
    %c0_52 = arith.constant 0 : index
    %c0_53 = arith.constant 0 : index
    %113 = vector.load %arg1[%112, %c0_52, %c0_53] : memref<8x8x512xf32, #tpu.memory_space<vmem>>, vector<1x8x512xf32>
    %114 = vector.shape_cast %113 : vector<1x8x512xf32> to vector<8x512xf32>
    %c0_54 = arith.constant 0 : index
    %c0_55 = arith.constant 0 : index
    %115 = vector.load %arg6[%c0_54, %c0_55] : memref<8x128xf32, #tpu.memory_space<vmem>>, vector<8x128xf32>
    %116 = arith.truncf %115 : vector<8x128xf32> to vector<8x128xbf16>
    %c0_56 = arith.constant 0 : index
    %c0_57 = arith.constant 0 : index
    %117 = vector.load %arg2[%c0_56, %c0_57] : memref<128x512xbf16, #tpu.memory_space<vmem>>, vector<128x512xbf16>
    %cst_58 = arith.constant dense<0.000000e+00> : vector<8x512xf32>
    %118 = tpu.matmul %116, %117, %cst_58 {dimension_numbers = #tpu.dot_dimension_numbers<[1], [0], [0], [1], [0, 0, 1, 1], [], []>} : vector<8x128xbf16>, vector<128x512xbf16>, vector<8x512xf32> -> vector<8x512xf32>
    %119 = arith.addf %114, %118 : vector<8x512xf32>
    %120 = vector.extract_strided_slice %119 {offsets = [0, 0], sizes = [8, 128], strides = [1, 1]} : vector<8x512xf32> to vector<8x128xf32>
    %121 = arith.negf %120 : vector<8x128xf32>
    %122 = math.exp %121 : vector<8x128xf32>
    %cst_59 = arith.constant 1.000000e+00 : f32
    %123 = vector.broadcast %cst_59 : f32 to vector<8x128xf32>
    %124 = arith.addf %123, %122 : vector<8x128xf32>
    %125 = arith.divf %123, %124 : vector<8x128xf32>
    %126 = vector.extract_strided_slice %119 {offsets = [0, 128], sizes = [8, 128], strides = [1, 1]} : vector<8x512xf32> to vector<8x128xf32>
    %127 = arith.negf %126 : vector<8x128xf32>
    %128 = math.exp %127 : vector<8x128xf32>
    %cst_60 = arith.constant 1.000000e+00 : f32
    %129 = vector.broadcast %cst_60 : f32 to vector<8x128xf32>
    %130 = arith.addf %129, %128 : vector<8x128xf32>
    %131 = arith.divf %129, %130 : vector<8x128xf32>
    %132 = vector.extract_strided_slice %119 {offsets = [0, 256], sizes = [8, 128], strides = [1, 1]} : vector<8x512xf32> to vector<8x128xf32>
    %133 = math.tanh %132 : vector<8x128xf32>
    %134 = vector.extract_strided_slice %119 {offsets = [0, 384], sizes = [8, 128], strides = [1, 1]} : vector<8x512xf32> to vector<8x128xf32>
    %135 = arith.negf %134 : vector<8x128xf32>
    %136 = math.exp %135 : vector<8x128xf32>
    %cst_61 = arith.constant 1.000000e+00 : f32
    %137 = vector.broadcast %cst_61 : f32 to vector<8x128xf32>
    %138 = arith.addf %137, %136 : vector<8x128xf32>
    %139 = arith.divf %137, %138 : vector<8x128xf32>
    %c0_62 = arith.constant 0 : index
    %c0_63 = arith.constant 0 : index
    %140 = vector.load %arg7[%c0_62, %c0_63] : memref<8x128xf32, #tpu.memory_space<vmem>>, vector<8x128xf32>
    %141 = arith.mulf %131, %140 : vector<8x128xf32>
    %142 = arith.mulf %125, %133 : vector<8x128xf32>
    %143 = arith.addf %141, %142 : vector<8x128xf32>
    %144 = math.tanh %143 : vector<8x128xf32>
    %145 = arith.mulf %139, %144 : vector<8x128xf32>
    %c0_64 = arith.constant 0 : index
    %c0_65 = arith.constant 0 : index
    %146 = vector.load %arg7[%c0_64, %c0_65] : memref<8x128xf32, #tpu.memory_space<vmem>>, vector<8x128xf32>
    tpu.vector_store %arg7[%c0_64, %c0_65], %143 {strides = array<i32>} : memref<8x128xf32, #tpu.memory_space<vmem>>, vector<8x128xf32>,
    %c0_66 = arith.constant 0 : index
    %c0_67 = arith.constant 0 : index
    %147 = vector.load %arg6[%c0_66, %c0_67] : memref<8x128xf32, #tpu.memory_space<vmem>>, vector<8x128xf32>
    tpu.vector_store %arg6[%c0_66, %c0_67], %145 {strides = array<i32>} : memref<8x128xf32, #tpu.memory_space<vmem>>, vector<8x128xf32>,
    %c4_i32 = arith.constant 4 : i32
    %148 = arith.index_cast %c4_i32 : i32 to index
    %c0_68 = arith.constant 0 : index
    %c0_69 = arith.constant 0 : index
    %149 = vector.load %arg1[%148, %c0_68, %c0_69] : memref<8x8x512xf32, #tpu.memory_space<vmem>>, vector<1x8x512xf32>
    %150 = vector.shape_cast %149 : vector<1x8x512xf32> to vector<8x512xf32>
    %c0_70 = arith.constant 0 : index
    %c0_71 = arith.constant 0 : index
    %151 = vector.load %arg6[%c0_70, %c0_71] : memref<8x128xf32, #tpu.memory_space<vmem>>, vector<8x128xf32>
    %152 = arith.truncf %151 : vector<8x128xf32> to vector<8x128xbf16>
    %c0_72 = arith.constant 0 : index
    %c0_73 = arith.constant 0 : index
    %153 = vector.load %arg2[%c0_72, %c0_73] : memref<128x512xbf16, #tpu.memory_space<vmem>>, vector<128x512xbf16>
    %cst_74 = arith.constant dense<0.000000e+00> : vector<8x512xf32>
    %154 = tpu.matmul %152, %153, %cst_74 {dimension_numbers = #tpu.dot_dimension_numbers<[1], [0], [0], [1], [0, 0, 1, 1], [], []>} : vector<8x128xbf16>, vector<128x512xbf16>, vector<8x512xf32> -> vector<8x512xf32>
    %155 = arith.addf %150, %154 : vector<8x512xf32>
    %156 = vector.extract_strided_slice %155 {offsets = [0, 0], sizes = [8, 128], strides = [1, 1]} : vector<8x512xf32> to vector<8x128xf32>
    %157 = arith.negf %156 : vector<8x128xf32>
    %158 = math.exp %157 : vector<8x128xf32>
    %cst_75 = arith.constant 1.000000e+00 : f32
    %159 = vector.broadcast %cst_75 : f32 to vector<8x128xf32>
    %160 = arith.addf %159, %158 : vector<8x128xf32>
    %161 = arith.divf %159, %160 : vector<8x128xf32>
    %162 = vector.extract_strided_slice %155 {offsets = [0, 128], sizes = [8, 128], strides = [1, 1]} : vector<8x512xf32> to vector<8x128xf32>
    %163 = arith.negf %162 : vector<8x128xf32>
    %164 = math.exp %163 : vector<8x128xf32>
    %cst_76 = arith.constant 1.000000e+00 : f32
    %165 = vector.broadcast %cst_76 : f32 to vector<8x128xf32>
    %166 = arith.addf %165, %164 : vector<8x128xf32>
    %167 = arith.divf %165, %166 : vector<8x128xf32>
    %168 = vector.extract_strided_slice %155 {offsets = [0, 256], sizes = [8, 128], strides = [1, 1]} : vector<8x512xf32> to vector<8x128xf32>
    %169 = math.tanh %168 : vector<8x128xf32>
    %170 = vector.extract_strided_slice %155 {offsets = [0, 384], sizes = [8, 128], strides = [1, 1]} : vector<8x512xf32> to vector<8x128xf32>
    %171 = arith.negf %170 : vector<8x128xf32>
    %172 = math.exp %171 : vector<8x128xf32>
    %cst_77 = arith.constant 1.000000e+00 : f32
    %173 = vector.broadcast %cst_77 : f32 to vector<8x128xf32>
    %174 = arith.addf %173, %172 : vector<8x128xf32>
    %175 = arith.divf %173, %174 : vector<8x128xf32>
    %c0_78 = arith.constant 0 : index
    %c0_79 = arith.constant 0 : index
    %176 = vector.load %arg7[%c0_78, %c0_79] : memref<8x128xf32, #tpu.memory_space<vmem>>, vector<8x128xf32>
    %177 = arith.mulf %167, %176 : vector<8x128xf32>
    %178 = arith.mulf %161, %169 : vector<8x128xf32>
    %179 = arith.addf %177, %178 : vector<8x128xf32>
    %180 = math.tanh %179 : vector<8x128xf32>
    %181 = arith.mulf %175, %180 : vector<8x128xf32>
    %c0_80 = arith.constant 0 : index
    %c0_81 = arith.constant 0 : index
    %182 = vector.load %arg7[%c0_80, %c0_81] : memref<8x128xf32, #tpu.memory_space<vmem>>, vector<8x128xf32>
    tpu.vector_store %arg7[%c0_80, %c0_81], %179 {strides = array<i32>} : memref<8x128xf32, #tpu.memory_space<vmem>>, vector<8x128xf32>,
    %c0_82 = arith.constant 0 : index
    %c0_83 = arith.constant 0 : index
    %183 = vector.load %arg6[%c0_82, %c0_83] : memref<8x128xf32, #tpu.memory_space<vmem>>, vector<8x128xf32>
    tpu.vector_store %arg6[%c0_82, %c0_83], %181 {strides = array<i32>} : memref<8x128xf32, #tpu.memory_space<vmem>>, vector<8x128xf32>,
    %c5_i32 = arith.constant 5 : i32
    %184 = arith.index_cast %c5_i32 : i32 to index
    %c0_84 = arith.constant 0 : index
    %c0_85 = arith.constant 0 : index
    %185 = vector.load %arg1[%184, %c0_84, %c0_85] : memref<8x8x512xf32, #tpu.memory_space<vmem>>, vector<1x8x512xf32>
    %186 = vector.shape_cast %185 : vector<1x8x512xf32> to vector<8x512xf32>
    %c0_86 = arith.constant 0 : index
    %c0_87 = arith.constant 0 : index
    %187 = vector.load %arg6[%c0_86, %c0_87] : memref<8x128xf32, #tpu.memory_space<vmem>>, vector<8x128xf32>
    %188 = arith.truncf %187 : vector<8x128xf32> to vector<8x128xbf16>
    %c0_88 = arith.constant 0 : index
    %c0_89 = arith.constant 0 : index
    %189 = vector.load %arg2[%c0_88, %c0_89] : memref<128x512xbf16, #tpu.memory_space<vmem>>, vector<128x512xbf16>
    %cst_90 = arith.constant dense<0.000000e+00> : vector<8x512xf32>
    %190 = tpu.matmul %188, %189, %cst_90 {dimension_numbers = #tpu.dot_dimension_numbers<[1], [0], [0], [1], [0, 0, 1, 1], [], []>} : vector<8x128xbf16>, vector<128x512xbf16>, vector<8x512xf32> -> vector<8x512xf32>
    %191 = arith.addf %186, %190 : vector<8x512xf32>
    %192 = vector.extract_strided_slice %191 {offsets = [0, 0], sizes = [8, 128], strides = [1, 1]} : vector<8x512xf32> to vector<8x128xf32>
    %193 = arith.negf %192 : vector<8x128xf32>
    %194 = math.exp %193 : vector<8x128xf32>
    %cst_91 = arith.constant 1.000000e+00 : f32
    %195 = vector.broadcast %cst_91 : f32 to vector<8x128xf32>
    %196 = arith.addf %195, %194 : vector<8x128xf32>
    %197 = arith.divf %195, %196 : vector<8x128xf32>
    %198 = vector.extract_strided_slice %191 {offsets = [0, 128], sizes = [8, 128], strides = [1, 1]} : vector<8x512xf32> to vector<8x128xf32>
    %199 = arith.negf %198 : vector<8x128xf32>
    %200 = math.exp %199 : vector<8x128xf32>
    %cst_92 = arith.constant 1.000000e+00 : f32
    %201 = vector.broadcast %cst_92 : f32 to vector<8x128xf32>
    %202 = arith.addf %201, %200 : vector<8x128xf32>
    %203 = arith.divf %201, %202 : vector<8x128xf32>
    %204 = vector.extract_strided_slice %191 {offsets = [0, 256], sizes = [8, 128], strides = [1, 1]} : vector<8x512xf32> to vector<8x128xf32>
    %205 = math.tanh %204 : vector<8x128xf32>
    %206 = vector.extract_strided_slice %191 {offsets = [0, 384], sizes = [8, 128], strides = [1, 1]} : vector<8x512xf32> to vector<8x128xf32>
    %207 = arith.negf %206 : vector<8x128xf32>
    %208 = math.exp %207 : vector<8x128xf32>
    %cst_93 = arith.constant 1.000000e+00 : f32
    %209 = vector.broadcast %cst_93 : f32 to vector<8x128xf32>
    %210 = arith.addf %209, %208 : vector<8x128xf32>
    %211 = arith.divf %209, %210 : vector<8x128xf32>
    %c0_94 = arith.constant 0 : index
    %c0_95 = arith.constant 0 : index
    %212 = vector.load %arg7[%c0_94, %c0_95] : memref<8x128xf32, #tpu.memory_space<vmem>>, vector<8x128xf32>
    %213 = arith.mulf %203, %212 : vector<8x128xf32>
    %214 = arith.mulf %197, %205 : vector<8x128xf32>
    %215 = arith.addf %213, %214 : vector<8x128xf32>
    %216 = math.tanh %215 : vector<8x128xf32>
    %217 = arith.mulf %211, %216 : vector<8x128xf32>
    %c0_96 = arith.constant 0 : index
    %c0_97 = arith.constant 0 : index
    %218 = vector.load %arg7[%c0_96, %c0_97] : memref<8x128xf32, #tpu.memory_space<vmem>>, vector<8x128xf32>
    tpu.vector_store %arg7[%c0_96, %c0_97], %215 {strides = array<i32>} : memref<8x128xf32, #tpu.memory_space<vmem>>, vector<8x128xf32>,
    %c0_98 = arith.constant 0 : index
    %c0_99 = arith.constant 0 : index
    %219 = vector.load %arg6[%c0_98, %c0_99] : memref<8x128xf32, #tpu.memory_space<vmem>>, vector<8x128xf32>
    tpu.vector_store %arg6[%c0_98, %c0_99], %217 {strides = array<i32>} : memref<8x128xf32, #tpu.memory_space<vmem>>, vector<8x128xf32>,
    %c6_i32 = arith.constant 6 : i32
    %220 = arith.index_cast %c6_i32 : i32 to index
    %c0_100 = arith.constant 0 : index
    %c0_101 = arith.constant 0 : index
    %221 = vector.load %arg1[%220, %c0_100, %c0_101] : memref<8x8x512xf32, #tpu.memory_space<vmem>>, vector<1x8x512xf32>
    %222 = vector.shape_cast %221 : vector<1x8x512xf32> to vector<8x512xf32>
    %c0_102 = arith.constant 0 : index
    %c0_103 = arith.constant 0 : index
    %223 = vector.load %arg6[%c0_102, %c0_103] : memref<8x128xf32, #tpu.memory_space<vmem>>, vector<8x128xf32>
    %224 = arith.truncf %223 : vector<8x128xf32> to vector<8x128xbf16>
    %c0_104 = arith.constant 0 : index
    %c0_105 = arith.constant 0 : index
    %225 = vector.load %arg2[%c0_104, %c0_105] : memref<128x512xbf16, #tpu.memory_space<vmem>>, vector<128x512xbf16>
    %cst_106 = arith.constant dense<0.000000e+00> : vector<8x512xf32>
    %226 = tpu.matmul %224, %225, %cst_106 {dimension_numbers = #tpu.dot_dimension_numbers<[1], [0], [0], [1], [0, 0, 1, 1], [], []>} : vector<8x128xbf16>, vector<128x512xbf16>, vector<8x512xf32> -> vector<8x512xf32>
    %227 = arith.addf %222, %226 : vector<8x512xf32>
    %228 = vector.extract_strided_slice %227 {offsets = [0, 0], sizes = [8, 128], strides = [1, 1]} : vector<8x512xf32> to vector<8x128xf32>
    %229 = arith.negf %228 : vector<8x128xf32>
    %230 = math.exp %229 : vector<8x128xf32>
    %cst_107 = arith.constant 1.000000e+00 : f32
    %231 = vector.broadcast %cst_107 : f32 to vector<8x128xf32>
    %232 = arith.addf %231, %230 : vector<8x128xf32>
    %233 = arith.divf %231, %232 : vector<8x128xf32>
    %234 = vector.extract_strided_slice %227 {offsets = [0, 128], sizes = [8, 128], strides = [1, 1]} : vector<8x512xf32> to vector<8x128xf32>
    %235 = arith.negf %234 : vector<8x128xf32>
    %236 = math.exp %235 : vector<8x128xf32>
    %cst_108 = arith.constant 1.000000e+00 : f32
    %237 = vector.broadcast %cst_108 : f32 to vector<8x128xf32>
    %238 = arith.addf %237, %236 : vector<8x128xf32>
    %239 = arith.divf %237, %238 : vector<8x128xf32>
    %240 = vector.extract_strided_slice %227 {offsets = [0, 256], sizes = [8, 128], strides = [1, 1]} : vector<8x512xf32> to vector<8x128xf32>
    %241 = math.tanh %240 : vector<8x128xf32>
    %242 = vector.extract_strided_slice %227 {offsets = [0, 384], sizes = [8, 128], strides = [1, 1]} : vector<8x512xf32> to vector<8x128xf32>
    %243 = arith.negf %242 : vector<8x128xf32>
    %244 = math.exp %243 : vector<8x128xf32>
    %cst_109 = arith.constant 1.000000e+00 : f32
    %245 = vector.broadcast %cst_109 : f32 to vector<8x128xf32>
    %246 = arith.addf %245, %244 : vector<8x128xf32>
    %247 = arith.divf %245, %246 : vector<8x128xf32>
    %c0_110 = arith.constant 0 : index
    %c0_111 = arith.constant 0 : index
    %248 = vector.load %arg7[%c0_110, %c0_111] : memref<8x128xf32, #tpu.memory_space<vmem>>, vector<8x128xf32>
    %249 = arith.mulf %239, %248 : vector<8x128xf32>
    %250 = arith.mulf %233, %241 : vector<8x128xf32>
    %251 = arith.addf %249, %250 : vector<8x128xf32>
    %252 = math.tanh %251 : vector<8x128xf32>
    %253 = arith.mulf %247, %252 : vector<8x128xf32>
    %c0_112 = arith.constant 0 : index
    %c0_113 = arith.constant 0 : index
    %254 = vector.load %arg7[%c0_112, %c0_113] : memref<8x128xf32, #tpu.memory_space<vmem>>, vector<8x128xf32>
    tpu.vector_store %arg7[%c0_112, %c0_113], %251 {strides = array<i32>} : memref<8x128xf32, #tpu.memory_space<vmem>>, vector<8x128xf32>,
    %c0_114 = arith.constant 0 : index
    %c0_115 = arith.constant 0 : index
    %255 = vector.load %arg6[%c0_114, %c0_115] : memref<8x128xf32, #tpu.memory_space<vmem>>, vector<8x128xf32>
    tpu.vector_store %arg6[%c0_114, %c0_115], %253 {strides = array<i32>} : memref<8x128xf32, #tpu.memory_space<vmem>>, vector<8x128xf32>,
    %c7_i32 = arith.constant 7 : i32
    %256 = arith.index_cast %c7_i32 : i32 to index
    %c0_116 = arith.constant 0 : index
    %c0_117 = arith.constant 0 : index
    %257 = vector.load %arg1[%256, %c0_116, %c0_117] : memref<8x8x512xf32, #tpu.memory_space<vmem>>, vector<1x8x512xf32>
    %258 = vector.shape_cast %257 : vector<1x8x512xf32> to vector<8x512xf32>
    %c0_118 = arith.constant 0 : index
    %c0_119 = arith.constant 0 : index
    %259 = vector.load %arg6[%c0_118, %c0_119] : memref<8x128xf32, #tpu.memory_space<vmem>>, vector<8x128xf32>
    %260 = arith.truncf %259 : vector<8x128xf32> to vector<8x128xbf16>
    %c0_120 = arith.constant 0 : index
    %c0_121 = arith.constant 0 : index
    %261 = vector.load %arg2[%c0_120, %c0_121] : memref<128x512xbf16, #tpu.memory_space<vmem>>, vector<128x512xbf16>
    %cst_122 = arith.constant dense<0.000000e+00> : vector<8x512xf32>
    %262 = tpu.matmul %260, %261, %cst_122 {dimension_numbers = #tpu.dot_dimension_numbers<[1], [0], [0], [1], [0, 0, 1, 1], [], []>} : vector<8x128xbf16>, vector<128x512xbf16>, vector<8x512xf32> -> vector<8x512xf32>
    %263 = arith.addf %258, %262 : vector<8x512xf32>
    %264 = vector.extract_strided_slice %263 {offsets = [0, 0], sizes = [8, 128], strides = [1, 1]} : vector<8x512xf32> to vector<8x128xf32>
    %265 = arith.negf %264 : vector<8x128xf32>
    %266 = math.exp %265 : vector<8x128xf32>
    %cst_123 = arith.constant 1.000000e+00 : f32
    %267 = vector.broadcast %cst_123 : f32 to vector<8x128xf32>
    %268 = arith.addf %267, %266 : vector<8x128xf32>
    %269 = arith.divf %267, %268 : vector<8x128xf32>
    %270 = vector.extract_strided_slice %263 {offsets = [0, 128], sizes = [8, 128], strides = [1, 1]} : vector<8x512xf32> to vector<8x128xf32>
    %271 = arith.negf %270 : vector<8x128xf32>
    %272 = math.exp %271 : vector<8x128xf32>
    %cst_124 = arith.constant 1.000000e+00 : f32
    %273 = vector.broadcast %cst_124 : f32 to vector<8x128xf32>
    %274 = arith.addf %273, %272 : vector<8x128xf32>
    %275 = arith.divf %273, %274 : vector<8x128xf32>
    %276 = vector.extract_strided_slice %263 {offsets = [0, 256], sizes = [8, 128], strides = [1, 1]} : vector<8x512xf32> to vector<8x128xf32>
    %277 = math.tanh %276 : vector<8x128xf32>
    %278 = vector.extract_strided_slice %263 {offsets = [0, 384], sizes = [8, 128], strides = [1, 1]} : vector<8x512xf32> to vector<8x128xf32>
    %279 = arith.negf %278 : vector<8x128xf32>
    %280 = math.exp %279 : vector<8x128xf32>
    %cst_125 = arith.constant 1.000000e+00 : f32
    %281 = vector.broadcast %cst_125 : f32 to vector<8x128xf32>
    %282 = arith.addf %281, %280 : vector<8x128xf32>
    %283 = arith.divf %281, %282 : vector<8x128xf32>
    %c0_126 = arith.constant 0 : index
    %c0_127 = arith.constant 0 : index
    %284 = vector.load %arg7[%c0_126, %c0_127] : memref<8x128xf32, #tpu.memory_space<vmem>>, vector<8x128xf32>
    %285 = arith.mulf %275, %284 : vector<8x128xf32>
    %286 = arith.mulf %269, %277 : vector<8x128xf32>
    %287 = arith.addf %285, %286 : vector<8x128xf32>
    %288 = math.tanh %287 : vector<8x128xf32>
    %289 = arith.mulf %283, %288 : vector<8x128xf32>
    %c0_128 = arith.constant 0 : index
    %c0_129 = arith.constant 0 : index
    %290 = vector.load %arg7[%c0_128, %c0_129] : memref<8x128xf32, #tpu.memory_space<vmem>>, vector<8x128xf32>
    tpu.vector_store %arg7[%c0_128, %c0_129], %287 {strides = array<i32>} : memref<8x128xf32, #tpu.memory_space<vmem>>, vector<8x128xf32>,
    %c0_130 = arith.constant 0 : index
    %c0_131 = arith.constant 0 : index
    %291 = vector.load %arg6[%c0_130, %c0_131] : memref<8x128xf32, #tpu.memory_space<vmem>>, vector<8x128xf32>
    tpu.vector_store %arg6[%c0_130, %c0_131], %289 {strides = array<i32>} : memref<8x128xf32, #tpu.memory_space<vmem>>, vector<8x128xf32>,
    %c8_i32 = arith.constant 8 : i32
    %c0_132 = arith.constant 0 : index
    %c0_133 = arith.constant 0 : index
    %292 = vector.load %arg6[%c0_132, %c0_133] : memref<8x128xf32, #tpu.memory_space<vmem>>, vector<8x128xf32>
    %293 = arith.truncf %292 : vector<8x128xf32> to vector<8x128xbf16>
    %c0_134 = arith.constant 0 : index
    %c0_135 = arith.constant 0 : index
    %294 = vector.load %arg3[%c0_134, %c0_135] : memref<128x128xbf16, #tpu.memory_space<vmem>>, vector<128x128xbf16>
    %cst_136 = arith.constant dense<0.000000e+00> : vector<8x128xf32>
    %295 = tpu.matmul %293, %294, %cst_136 {dimension_numbers = #tpu.dot_dimension_numbers<[1], [0], [0], [1], [0, 0, 1, 1], [], []>} : vector<8x128xbf16>, vector<128x128xbf16>, vector<8x128xf32> -> vector<8x128xf32>
    %c0_137 = arith.constant 0 : index
    %c0_138 = arith.constant 0 : index
    %296 = vector.load %arg4[%c0_137, %c0_138] : memref<1x128xf32, #tpu.memory_space<vmem>>, vector<1x128xf32>
    %297 = vector.broadcast %296 : vector<1x128xf32> to vector<8x128xf32>
    %298 = arith.addf %295, %297 : vector<8x128xf32>
    %c0_139 = arith.constant 0 : index
    %c0_140 = arith.constant 0 : index
    %299 = vector.load %arg5[%c0_139, %c0_140] : memref<8x128xf32, #tpu.memory_space<vmem>>, vector<8x128xf32>
    tpu.vector_store %arg5[%c0_139, %c0_140], %298 {strides = array<i32>} : memref<8x128xf32, #tpu.memory_space<vmem>>, vector<8x128xf32>,
    return
  }
  func.func @transform_0(%arg0: i32) -> (i32, i32, i32) {
    %c0_i32 = arith.constant 0 : i32
    %c0_i32_0 = arith.constant 0 : i32
    %c0_i32_1 = arith.constant 0 : i32
    %c0_i32_2 = arith.constant 0 : i32
    return %c0_i32, %c0_i32_0, %c0_i32_1 : i32, i32, i32
  }
  func.func @transform_1(%arg0: i32) -> (i32, i32) {
    %c0_i32 = arith.constant 0 : i32
    %c0_i32_0 = arith.constant 0 : i32
    %c0_i32_1 = arith.constant 0 : i32
    return %c0_i32, %c0_i32_0 : i32, i32
  }
  func.func @transform_2(%arg0: i32) -> (i32, i32) {
    %c0_i32 = arith.constant 0 : i32
    %c0_i32_0 = arith.constant 0 : i32
    %c0_i32_1 = arith.constant 0 : i32
    return %c0_i32, %c0_i32_0 : i32, i32
  }
  func.func @transform_3(%arg0: i32) -> (i32, i32) {
    %c0_i32 = arith.constant 0 : i32
    %c0_i32_0 = arith.constant 0 : i32
    %c0_i32_1 = arith.constant 0 : i32
    return %c0_i32, %c0_i32_0 : i32, i32
  }
  func.func @transform_4(%arg0: i32) -> (i32, i32) {
    %c0_i32 = arith.constant 0 : i32
    %c0_i32_0 = arith.constant 0 : i32
    %c0_i32_1 = arith.constant 0 : i32
    return %c0_i32, %c0_i32_0 : i32, i32
  }
}

</mosaic_0001>

<llo_original>
// kernel: tpu_custom_call.1
$region0: #{tpu_custom_call.1}
  #allocation0 [shape = 'u32[]', space=smem, size = 0x4, offset = 0x4, fixed_abs, tag = 'smem constant byte address 0x4 - core index']
  #allocation1 [shape = 'u32[144,128]{1,0:T(1,128)}', space=vmem, size = 0x12000, scoped, tag = 'internal scratch']
  #allocation2 [shape = 'f32[8,128]{1,0:T(8,128)}', space=vmem, size = 0x1000, scoped, tag = 'scratch operand']
  #allocation3 [shape = 'f32[8,128]{1,0:T(8,128)}', space=vmem, size = 0x1000, scoped, tag = 'scratch operand']
  %s0 = inlined_call_operand.hbm [shape: f32[8,8,512], index: 0, kind: input, shape index: {}]
  %s1 = inlined_call_operand.hbm [shape: bf16[128,512], index: 1, kind: input, shape index: {}]
  %s2 = inlined_call_operand.hbm [shape: bf16[128,128], index: 2, kind: input, shape index: {}]
  %s3 = inlined_call_operand.vmem [shape: f32[1,128], index: 3, kind: input, shape index: {}]
  %s4 = inlined_call_operand.hbm [shape: f32[8,128], index: 4, kind: output, shape index: {}]
  %s5 = sld [smem:[#allocation0]]
  $region38: #{tpu_custom_call.1} parent=0
    _
  %s7 = ssub.s32 1, %s5
  %s8 = scalar_select 0, %s7, %s5
  $region1: #{tpu_custom_call.1} parent=0
    #allocation4 [shape = 'u8[131072]{0}', space=vmem, size = 0x20000, scoped, tag = 'input window, operand 0, single buffered']
    #allocation5 [shape = 's32[1]{0}', space=sflag, size = 0x4, scoped, tag = 'scoped memory for tpu_custom_call.1']
    #allocation6 [shape = 's32[1]{0}', space=sflag, size = 0x4, scoped, tag = 'scoped memory for tpu_custom_call.1']
    #allocation7 [shape = 'u8[131072]{0}', space=vmem, size = 0x20000, scoped, tag = 'input window, operand 1, single buffered']
    #allocation8 [shape = 's32[1]{0}', space=sflag, size = 0x4, scoped, tag = 'scoped memory for tpu_custom_call.1']
    #allocation9 [shape = 'u8[32768]{0}', space=vmem, size = 0x8000, scoped, tag = 'input window, operand 2, single buffered']
    #allocation10 [shape = 'u8[4096]{0}', space=vmem, size = 0x1000, scoped, tag = 'output window, operand 0, single buffered']
    %9 = vsyncpa [#allocation5], 0
    %10 = vsyncpa [#allocation8], 0
    %11 = vsyncpa [#allocation6], 0
    // Predicated region
    $region2: #{tpu_custom_call.1} parent=1 // pred_check
      _
    $region3: #{tpu_custom_call.1} parent=1 // pred_check_branch
      %13 = sbr.rel (0) target = $region5
    $region4: #{tpu_custom_call.1} parent=1 // pred_region
      %s15 = ssub.s32 4096, 4096
      %16 = vsyncadd [#allocation5], %s15
      %s17 = sshll.u32 [#allocation4], 4
      %s18 = int_to_ptr.vmem [resolvable:$true] %s17
      %23 = dma.hbm_to_vmem [thread:$0]  %s0, 4096, %s18, [#allocation5], 512, 512, 32
    $region5: #{tpu_custom_call.1} parent=1 // pred_fallthru
      _
    // Predicated region
    $region6: #{tpu_custom_call.1} parent=1 // pred_check
      _
    $region7: #{tpu_custom_call.1} parent=1 // pred_check_branch
      %25 = sbr.rel (0) target = $region9
    $region8: #{tpu_custom_call.1} parent=1 // pred_region
      %s27 = ssub.s32 4096, 4096
      %28 = vsyncadd [#allocation8], %s27
      %s29 = sshll.u32 [#allocation7], 4
      %s30 = int_to_ptr.vmem [resolvable:$true] %s29
      %35 = dma.hbm_to_vmem [thread:$0]  %s1, 4096, %s30, [#allocation8], 256, 256, 16
    $region9: #{tpu_custom_call.1} parent=1 // pred_fallthru
      _
    // Predicated region
    $region10: #{tpu_custom_call.1} parent=1 // pred_check
      _
    $region11: #{tpu_custom_call.1} parent=1 // pred_check_branch
      %37 = sbr.rel (0) target = $region13
    $region12: #{tpu_custom_call.1} parent=1 // pred_region
      %s39 = ssub.s32 1024, 1024
      %40 = vsyncadd [#allocation8], %s39
      %s41 = sshll.u32 [#allocation9], 4
      %s42 = int_to_ptr.vmem [resolvable:$true] %s41
      %47 = dma.hbm_to_vmem [thread:$0]  %s2, 1024, %s42, [#allocation8], 64, 64, 4
    $region13: #{tpu_custom_call.1} parent=1 // pred_fallthru
      _
    // Predicated region
    $region14: #{tpu_custom_call.1} parent=1 // pred_check
      _
    $region15: #{tpu_custom_call.1} parent=1 // pred_check_branch
      %49 = sbr.rel (0) target = $region17
    $region16: #{tpu_custom_call.1} parent=1 // pred_region
      _
    $region17: #{tpu_custom_call.1} parent=1 // pred_fallthru
      _
    // Predicated region
    $region18: #{tpu_custom_call.1} parent=1 // pred_check
      _
    $region19: #{tpu_custom_call.1} parent=1 // pred_check_branch
      %51 = sbr.rel (0) target = $region21
    $region20: #{tpu_custom_call.1} parent=1 // pred_region
      %52 = dma.done [#allocation5], 4096
    $region21: #{tpu_custom_call.1} parent=1 // pred_fallthru
      _
    // Predicated region
    $region22: #{tpu_custom_call.1} parent=1 // pred_check
      _
    $region23: #{tpu_custom_call.1} parent=1 // pred_check_branch
      %54 = sbr.rel (0) target = $region25
    $region24: #{tpu_custom_call.1} parent=1 // pred_region
      %55 = dma.done [#allocation8], 4096
    $region25: #{tpu_custom_call.1} parent=1 // pred_fallthru
      _
    // Predicated region
    $region26: #{tpu_custom_call.1} parent=1 // pred_check
      _
    $region27: #{tpu_custom_call.1} parent=1 // pred_check_branch
      %57 = sbr.rel (0) target = $region29
    $region28: #{tpu_custom_call.1} parent=1 // pred_region
      %58 = dma.done [#allocation8], 1024
    $region29: #{tpu_custom_call.1} parent=1 // pred_fallthru
      _
    %60 = vst [vmem:[#allocation2] sm:$0xff] 0.0
    %61 = vst [vmem:[#allocation3] sm:$0xff] 0.0
    %v62 = vld [vmem:[#allocation4] sm:$0xff]
    %v63 = vld [vmem:[#allocation4 + $0x8] sm:$0xff]
    %v64 = vld [vmem:[#allocation4 + $0x10] sm:$0xff]
    %v65 = vld [vmem:[#allocation4 + $0x18] sm:$0xff]
    %v66 = vld [vmem:[#allocation2] sm:$0xff]
    %v67 = vpack.c.bf16 %v66, %v66
    %v68 = vld [vmem:[#allocation7] sm:$0xff]
    %v69 = vld [vmem:[#allocation7 + $0x8] sm:$0xff]
    %v70 = vld [vmem:[#allocation7 + $0x10] sm:$0xff]
    %v71 = vld [vmem:[#allocation7 + $0x18] sm:$0xff]
    %v72 = vld [vmem:[#allocation7 + $0x20] sm:$0xff]
    %v73 = vld [vmem:[#allocation7 + $0x28] sm:$0xff]
    %v74 = vld [vmem:[#allocation7 + $0x30] sm:$0xff]
    %v75 = vld [vmem:[#allocation7 + $0x38] sm:$0xff]
    %v76 = vld [vmem:[#allocation7 + $0x40] sm:$0xff]
    %v77 = vld [vmem:[#allocation7 + $0x48] sm:$0xff]
    %v78 = vld [vmem:[#allocation7 + $0x50] sm:$0xff]
    %v79 = vld [vmem:[#allocation7 + $0x58] sm:$0xff]
    %v80 = vld [vmem:[#allocation7 + $0x60] sm:$0xff]
    %v81 = vld [vmem:[#allocation7 + $0x68] sm:$0xff]
    %v82 = vld [vmem:[#allocation7 + $0x70] sm:$0xff]
    %v83 = vld [vmem:[#allocation7 + $0x78] sm:$0xff]
    %v84 = vld [vmem:[#allocation7 + $0x80] sm:$0xff]
    %v85 = vld [vmem:[#allocation7 + $0x88] sm:$0xff]
    %v86 = vld [vmem:[#allocation7 + $0x90] sm:$0xff]
    %v87 = vld [vmem:[#allocation7 + $0x98] sm:$0xff]
    %v88 = vld [vmem:[#allocation7 + $0xa0] sm:$0xff]
    %v89 = vld [vmem:[#allocation7 + $0xa8] sm:$0xff]
    %v90 = vld [vmem:[#allocation7 + $0xb0] sm:$0xff]
    %v91 = vld [vmem:[#allocation7 + $0xb8] sm:$0xff]
    %v92 = vld [vmem:[#allocation7 + $0xc0] sm:$0xff]
    %v93 = vld [vmem:[#allocation7 + $0xc8] sm:$0xff]
    %v94 = vld [vmem:[#allocation7 + $0xd0] sm:$0xff]
    %v95 = vld [vmem:[#allocation7 + $0xd8] sm:$0xff]
    %v96 = vld [vmem:[#allocation7 + $0xe0] sm:$0xff]
    %v97 = vld [vmem:[#allocation7 + $0xe8] sm:$0xff]
    %v98 = vld [vmem:[#allocation7 + $0xf0] sm:$0xff]
    %v99 = vld [vmem:[#allocation7 + $0xf8] sm:$0xff]
    %v132 = vunpack.c.l.b16 %v68
    %v133 = vunpack.c.h.b16 %v68
    %v134 = vunpack.c.l.b16 %v69
    %v135 = vunpack.c.h.b16 %v69
    %v136 = vunpack.c.l.b16 %v70
    %v137 = vunpack.c.h.b16 %v70
    %v138 = vunpack.c.l.b16 %v71
    %v139 = vunpack.c.h.b16 %v71
    %v140 = vunpack.c.l.b16 %v72
    %v141 = vunpack.c.h.b16 %v72
    %v142 = vunpack.c.l.b16 %v73
    %v143 = vunpack.c.h.b16 %v73
    %v144 = vunpack.c.l.b16 %v74
    %v145 = vunpack.c.h.b16 %v74
    %v146 = vunpack.c.l.b16 %v75
    %v147 = vunpack.c.h.b16 %v75
    %v148 = vunpack.c.l.b16 %v76
    %v149 = vunpack.c.h.b16 %v76
    %v150 = vunpack.c.l.b16 %v77
    %v151 = vunpack.c.h.b16 %v77
    %v152 = vunpack.c.l.b16 %v78
    %v153 = vunpack.c.h.b16 %v78
    %v154 = vunpack.c.l.b16 %v79
    %v155 = vunpack.c.h.b16 %v79
    %v156 = vunpack.c.l.b16 %v80
    %v157 = vunpack.c.h.b16 %v80
    %v158 = vunpack.c.l.b16 %v81
    %v159 = vunpack.c.h.b16 %v81
    %v160 = vunpack.c.l.b16 %v82
    %v161 = vunpack.c.h.b16 %v82
    %v162 = vunpack.c.l.b16 %v83
    %v163 = vunpack.c.h.b16 %v83
    %v164 = vunpack.c.l.b16 %v84
    %v165 = vunpack.c.h.b16 %v84
    %v166 = vunpack.c.l.b16 %v85
    %v167 = vunpack.c.h.b16 %v85
    %v168 = vunpack.c.l.b16 %v86
    %v169 = vunpack.c.h.b16 %v86
    %v170 = vunpack.c.l.b16 %v87
    %v171 = vunpack.c.h.b16 %v87
    %v172 = vunpack.c.l.b16 %v88
    %v173 = vunpack.c.h.b16 %v88
    %v174 = vunpack.c.l.b16 %v89
    %v175 = vunpack.c.h.b16 %v89
    %v176 = vunpack.c.l.b16 %v90
    %v177 = vunpack.c.h.b16 %v90
    %v178 = vunpack.c.l.b16 %v91
    %v179 = vunpack.c.h.b16 %v91
    %v180 = vunpack.c.l.b16 %v92
    %v181 = vunpack.c.h.b16 %v92
    %v182 = vunpack.c.l.b16 %v93
    %v183 = vunpack.c.h.b16 %v93
    %v184 = vunpack.c.l.b16 %v94
    %v185 = vunpack.c.h.b16 %v94
    %v186 = vunpack.c.l.b16 %v95
    %v187 = vunpack.c.h.b16 %v95
    %v188 = vunpack.c.l.b16 %v96
    %v189 = vunpack.c.h.b16 %v96
    %v190 = vunpack.c.l.b16 %v97
    %v191 = vunpack.c.h.b16 %v97
    %v192 = vunpack.c.l.b16 %v98
    %v193 = vunpack.c.h.b16 %v98
    %v194 = vunpack.c.l.b16 %v99
    %v195 = vunpack.c.h.b16 %v99
    %v196 = vpack.c.b16 %v136, %v132
    %v197 = vpack.c.b16 %v137, %v133
    %v198 = vpack.c.b16 %v138, %v134
    %v199 = vpack.c.b16 %v139, %v135
    %v200 = vpack.c.b16 %v144, %v140
    %v201 = vpack.c.b16 %v145, %v141
    %v202 = vpack.c.b16 %v146, %v142
    %v203 = vpack.c.b16 %v147, %v143
    %v204 = vpack.c.b16 %v152, %v148
    %v205 = vpack.c.b16 %v153, %v149
    %v206 = vpack.c.b16 %v154, %v150
    %v207 = vpack.c.b16 %v155, %v151
    %v208 = vpack.c.b16 %v160, %v156
    %v209 = vpack.c.b16 %v161, %v157
    %v210 = vpack.c.b16 %v162, %v158
    %v211 = vpack.c.b16 %v163, %v159
    %v212 = vpack.c.b16 %v168, %v164
    %v213 = vpack.c.b16 %v169, %v165
    %v214 = vpack.c.b16 %v170, %v166
    %v215 = vpack.c.b16 %v171, %v167
    %v216 = vpack.c.b16 %v176, %v172
    %v217 = vpack.c.b16 %v177, %v173
    %v218 = vpack.c.b16 %v178, %v174
    %v219 = vpack.c.b16 %v179, %v175
    %v220 = vpack.c.b16 %v184, %v180
    %v221 = vpack.c.b16 %v185, %v181
    %v222 = vpack.c.b16 %v186, %v182
    %v223 = vpack.c.b16 %v187, %v183
    %v224 = vpack.c.b16 %v192, %v188
    %v225 = vpack.c.b16 %v193, %v189
    %v226 = vpack.c.b16 %v194, %v190
    %v227 = vpack.c.b16 %v195, %v191
    %260 = vmatprep.subr.bf16.mxu0 %v197
    %261 = vmatpush1.bf16.msra.mxu0 %v196
    %262 = vmatprep.subr.bf16.mxu0 %v201
    %263 = vmatpush1.bf16.msra.mxu0 %v200
    %264 = vmatprep.subr.bf16.mxu0 %v205
    %265 = vmatpush1.bf16.msra.mxu0 %v204
    %266 = vmatprep.subr.bf16.mxu0 %v209
    %267 = vmatpush1.bf16.msra.mxu0 %v208
    %268 = vmatprep.subr.bf16.mxu0 %v213
    %269 = vmatpush1.bf16.msra.mxu0 %v212
    %270 = vmatprep.subr.bf16.mxu0 %v217
    %271 = vmatpush1.bf16.msra.mxu0 %v216
    %272 = vmatprep.subr.bf16.mxu0 %v221
    %273 = vmatpush1.bf16.msra.mxu0 %v220
    %274 = vmatprep.subr.bf16.mxu0 %v225
    %275 = vmatpush1.bf16.msra.mxu0 %v224
    %276 = vmatprep.subr.bf16.mxu0 0
    %277 = vmatpush1.bf16.msra.mxu0 0
    %278 = vmatprep.subr.bf16.mxu0 0
    %279 = vmatpush1.bf16.msra.mxu0 0
    %280 = vmatprep.subr.bf16.mxu0 0
    %281 = vmatpush1.bf16.msra.mxu0 0
    %282 = vmatprep.subr.bf16.mxu0 0
    %283 = vmatpush1.bf16.msra.mxu0 0
    %284 = vmatprep.subr.bf16.mxu0 0
    %285 = vmatpush1.bf16.msra.mxu0 0
    %286 = vmatprep.subr.bf16.mxu0 0
    %287 = vmatpush1.bf16.msra.mxu0 0
    %288 = vmatprep.subr.bf16.mxu0 0
    %289 = vmatpush1.bf16.msra.mxu0 0
    %290 = vmatprep.subr.bf16.mxu0 0
    %291 = vmatpush1.bf16.msra.mxu0 0
    %292 = vmatprep.mubr.bf16.mxu0 0
    %293 = vmatmul.mubr.bf16.gmra.mrb[0].mxu0 %v67
    %v294 = vpop.f32.mrb[0].mxu0
    %v295 = vadd.f32 0.0, %v294
    %v296 = vpop.f32.mrb[0].mxu0
    %v297 = vadd.f32 0.0, %v296
    %v298 = vpop.f32.mrb[0].mxu0
    %v299 = vpop.f32.mrb[0].mxu0
    %300 = vdwg.mxu0
    %301 = vmatprep.subr.bf16.mxu0 %v199
    %302 = vmatpush1.bf16.msra.mxu0 %v198
    %303 = vmatprep.subr.bf16.mxu0 %v203
    %304 = vmatpush1.bf16.msra.mxu0 %v202
    %305 = vmatprep.subr.bf16.mxu0 %v207
    %306 = vmatpush1.bf16.msra.mxu0 %v206
    %307 = vmatprep.subr.bf16.mxu0 %v211
    %308 = vmatpush1.bf16.msra.mxu0 %v210
    %309 = vmatprep.subr.bf16.mxu0 %v215
    %310 = vmatpush1.bf16.msra.mxu0 %v214
    %311 = vmatprep.subr.bf16.mxu0 %v219
    %312 = vmatpush1.bf16.msra.mxu0 %v218
    %313 = vmatprep.subr.bf16.mxu0 %v223
    %314 = vmatpush1.bf16.msra.mxu0 %v222
    %315 = vmatprep.subr.bf16.mxu0 %v227
    %316 = vmatpush1.bf16.msra.mxu0 %v226
    %317 = vmatprep.subr.bf16.mxu0 0
    %318 = vmatpush1.bf16.msra.mxu0 0
    %319 = vmatprep.subr.bf16.mxu0 0
    %320 = vmatpush1.bf16.msra.mxu0 0
    %321 = vmatprep.subr.bf16.mxu0 0
    %322 = vmatpush1.bf16.msra.mxu0 0
    %323 = vmatprep.subr.bf16.mxu0 0
    %324 = vmatpush1.bf16.msra.mxu0 0
    %325 = vmatprep.subr.bf16.mxu0 0
    %326 = vmatpush1.bf16.msra.mxu0 0
    %327 = vmatprep.subr.bf16.mxu0 0
    %328 = vmatpush1.bf16.msra.mxu0 0
    %329 = vmatprep.subr.bf16.mxu0 0
    %330 = vmatpush1.bf16.msra.mxu0 0
    %331 = vmatprep.subr.bf16.mxu0 0
    %332 = vmatpush1.bf16.msra.mxu0 0
    %333 = vmatprep.mubr.bf16.mxu0 0
    %334 = vmatmul.mubr.bf16.gmra.mrb[0].mxu0 %v67
    %v335 = vpop.f32.mrb[0].mxu0
    %v336 = vadd.f32 0.0, %v335
    %v337 = vpop.f32.mrb[0].mxu0
    %v338 = vadd.f32 0.0, %v337
    %v339 = vpop.f32.mrb[0].mxu0
    %v340 = vpop.f32.mrb[0].mxu0
    %341 = vdwg.mxu0
    %v342 = vadd.f32 %v62, %v295
    %v343 = vadd.f32 %v63, %v297
    %v344 = vadd.f32 %v64, %v336
    %v345 = vadd.f32 %v65, %v338
    %v346 = vxor.u32 %v342, 2147483648
    %v347 = vmul.f32 %v346, 1.442695
    %v348 = vpow.pop %v347
    %v349 = vadd.f32 %v348, 1.0
    %v350 = vrcp.pop %v349
    %v351 = vmul.f32 1.0, %v350
    %v352 = vxor.u32 %v343, 2147483648
    %v353 = vmul.f32 %v352, 1.442695
    %v354 = vpow.pop %v353
    %v355 = vadd.f32 %v354, 1.0
    %v356 = vrcp.pop %v355
    %v357 = vmul.f32 1.0, %v356
    %v358 = vtanh.pop %v344
    %v359 = vxor.u32 %v345, 2147483648
    %v360 = vmul.f32 %v359, 1.442695
    %v361 = vpow.pop %v360
    %v362 = vadd.f32 %v361, 1.0
    %v363 = vrcp.pop %v362
    %v364 = vmul.f32 1.0, %v363
    %v365 = vld [vmem:[#allocation3] sm:$0xff]
    %v366 = vmul.f32 %v357, %v365
    %v367 = vmul.f32 %v351, %v358
    %v368 = vadd.f32 %v366, %v367
    %v369 = vtanh.pop %v368
    %v370 = vmul.f32 %v364, %v369
    %371 = vst [vmem:[#allocation3] sm:$0xff] %v368
    %372 = vst [vmem:[#allocation2] sm:$0xff] %v370
    %s373 = scalar_lea.vmem [#allocation4], 32
    %v374 = vld [vmem:[%s373] sm:$0xff]
    %v375 = vld [vmem:[%s373 + $0x8] sm:$0xff]
    %v376 = vld [vmem:[%s373 + $0x10] sm:$0xff]
    %v377 = vld [vmem:[%s373 + $0x18] sm:$0xff]
    %v378 = vld [vmem:[#allocation2] sm:$0xff]
    %v379 = vpack.c.bf16 %v378, %v378
    %v380 = vld [vmem:[#allocation7] sm:$0xff]
    %v381 = vld [vmem:[#allocation7 + $0x8] sm:$0xff]
    %v382 = vld [vmem:[#allocation7 + $0x10] sm:$0xff]
    %v383 = vld [vmem:[#allocation7 + $0x18] sm:$0xff]
    %v384 = vld [vmem:[#allocation7 + $0x20] sm:$0xff]
    %v385 = vld [vmem:[#allocation7 + $0x28] sm:$0xff]
    %v386 = vld [vmem:[#allocation7 + $0x30] sm:$0xff]
    %v387 = vld [vmem:[#allocation7 + $0x38] sm:$0xff]
    %v388 = vld [vmem:[#allocation7 + $0x40] sm:$0xff]
    %v389 = vld [vmem:[#allocation7 + $0x48] sm:$0xff]
    %v390 = vld [vmem:[#allocation7 + $0x50] sm:$0xff]
    %v391 = vld [vmem:[#allocation7 + $0x58] sm:$0xff]
    %v392 = vld [vmem:[#allocation7 + $0x60] sm:$0xff]
    %v393 = vld [vmem:[#allocation7 + $0x68] sm:$0xff]
    %v394 = vld [vmem:[#allocation7 + $0x70] sm:$0xff]
    %v395 = vld [vmem:[#allocation7 + $0x78] sm:$0xff]
    %v396 = vld [vmem:[#allocation7 + $0x80] sm:$0xff]
    %v397 = vld [vmem:[#allocation7 + $0x88] sm:$0xff]
    %v398 = vld [vmem:[#allocation7 + $0x90] sm:$0xff]
    %v399 = vld [vmem:[#allocation7 + $0x98] sm:$0xff]
    %v400 = vld [vmem:[#allocation7 + $0xa0] sm:$0xff]
    %v401 = vld [vmem:[#allocation7 + $0xa8] sm:$0xff]
    %v402 = vld [vmem:[#allocation7 + $0xb0] sm:$0xff]
    %v403 = vld [vmem:[#allocation7 + $0xb8] sm:$0xff]
    %v404 = vld [vmem:[#allocation7 + $0xc0] sm:$0xff]
    %v405 = vld [vmem:[#allocation7 + $0xc8] sm:$0xff]
    %v406 = vld [vmem:[#allocation7 + $0xd0] sm:$0xff]
    %v407 = vld [vmem:[#allocation7 + $0xd8] sm:$0xff]
    %v408 = vld [vmem:[#allocation7 + $0xe0] sm:$0xff]
    %v409 = vld [vmem:[#allocation7 + $0xe8] sm:$0xff]
    %v410 = vld [vmem:[#allocation7 + $0xf0] sm:$0xff]
    %v411 = vld [vmem:[#allocation7 + $0xf8] sm:$0xff]
    %v444 = vunpack.c.l.b16 %v380
    %v445 = vunpack.c.h.b16 %v380
    %v446 = vunpack.c.l.b16 %v381
    %v447 = vunpack.c.h.b16 %v381
    %v448 = vunpack.c.l.b16 %v382
    %v449 = vunpack.c.h.b16 %v382
    %v450 = vunpack.c.l.b16 %v383
    %v451 = vunpack.c.h.b16 %v383
    %v452 = vunpack.c.l.b16 %v384
    %v453 = vunpack.c.h.b16 %v384
    %v454 = vunpack.c.l.b16 %v385
    %v455 = vunpack.c.h.b16 %v385
    %v456 = vunpack.c.l.b16 %v386
    %v457 = vunpack.c.h.b16 %v386
    %v458 = vunpack.c.l.b16 %v387
    %v459 = vunpack.c.h.b16 %v387
    %v460 = vunpack.c.l.b16 %v388
    %v461 = vunpack.c.h.b16 %v388
    %v462 = vunpack.c.l.b16 %v389
    %v463 = vunpack.c.h.b16 %v389
    %v464 = vunpack.c.l.b16 %v390
    %v465 = vunpack.c.h.b16 %v390
    %v466 = vunpack.c.l.b16 %v391
    %v467 = vunpack.c.h.b16 %v391
    %v468 = vunpack.c.l.b16 %v392
    %v469 = vunpack.c.h.b16 %v392
    %v470 = vunpack.c.l.b16 %v393
    %v471 = vunpack.c.h.b16 %v393
    %v472 = vunpack.c.l.b16 %v394
    %v473 = vunpack.c.h.b16 %v394
    %v474 = vunpack.c.l.b16 %v395
    %v475 = vunpack.c.h.b16 %v395
    %v476 = vunpack.c.l.b16 %v396
    %v477 = vunpack.c.h.b16 %v396
    %v478 = vunpack.c.l.b16 %v397
    %v479 = vunpack.c.h.b16 %v397
    %v480 = vunpack.c.l.b16 %v398
    %v481 = vunpack.c.h.b16 %v398
    %v482 = vunpack.c.l.b16 %v399
    %v483 = vunpack.c.h.b16 %v399
    %v484 = vunpack.c.l.b16 %v400
    %v485 = vunpack.c.h.b16 %v400
    %v486 = vunpack.c.l.b16 %v401
    %v487 = vunpack.c.h.b16 %v401
    %v488 = vunpack.c.l.b16 %v402
    %v489 = vunpack.c.h.b16 %v402
    %v490 = vunpack.c.l.b16 %v403
    %v491 = vunpack.c.h.b16 %v403
    %v492 = vunpack.c.l.b16 %v404
    %v493 = vunpack.c.h.b16 %v404
    %v494 = vunpack.c.l.b16 %v405
    %v495 = vunpack.c.h.b16 %v405
    %v496 = vunpack.c.l.b16 %v406
    %v497 = vunpack.c.h.b16 %v406
    %v498 = vunpack.c.l.b16 %v407
    %v499 = vunpack.c.h.b16 %v407
    %v500 = vunpack.c.l.b16 %v408
    %v501 = vunpack.c.h.b16 %v408
    %v502 = vunpack.c.l.b16 %v409
    %v503 = vunpack.c.h.b16 %v409
    %v504 = vunpack.c.l.b16 %v410
    %v505 = vunpack.c.h.b16 %v410
    %v506 = vunpack.c.l.b16 %v411
    %v507 = vunpack.c.h.b16 %v411
    %v508 = vpack.c.b16 %v448, %v444
    %v509 = vpack.c.b16 %v449, %v445
    %v510 = vpack.c.b16 %v450, %v446
    %v511 = vpack.c.b16 %v451, %v447
    %v512 = vpack.c.b16 %v456, %v452
    %v513 = vpack.c.b16 %v457, %v453
    %v514 = vpack.c.b16 %v458, %v454
    %v515 = vpack.c.b16 %v459, %v455
    %v516 = vpack.c.b16 %v464, %v460
    %v517 = vpack.c.b16 %v465, %v461
    %v518 = vpack.c.b16 %v466, %v462
    %v519 = vpack.c.b16 %v467, %v463
    %v520 = vpack.c.b16 %v472, %v468
    %v521 = vpack.c.b16 %v473, %v469
    %v522 = vpack.c.b16 %v474, %v470
    %v523 = vpack.c.b16 %v475, %v471
    %v524 = vpack.c.b16 %v480, %v476
    %v525 = vpack.c.b16 %v481, %v477
    %v526 = vpack.c.b16 %v482, %v478
    %v527 = vpack.c.b16 %v483, %v479
    %v528 = vpack.c.b16 %v488, %v484
    %v529 = vpack.c.b16 %v489, %v485
    %v530 = vpack.c.b16 %v490, %v486
    %v531 = vpack.c.b16 %v491, %v487
    %v532 = vpack.c.b16 %v496, %v492
    %v533 = vpack.c.b16 %v497, %v493
    %v534 = vpack.c.b16 %v498, %v494
    %v535 = vpack.c.b16 %v499, %v495
    %v536 = vpack.c.b16 %v504, %v500
    %v537 = vpack.c.b16 %v505, %v501
    %v538 = vpack.c.b16 %v506, %v502
    %v539 = vpack.c.b16 %v507, %v503
    %572 = vmatprep.subr.bf16.mxu0 %v509
    %573 = vmatpush1.bf16.msra.mxu0 %v508
    %574 = vmatprep.subr.bf16.mxu0 %v513
    %575 = vmatpush1.bf16.msra.mxu0 %v512
    %576 = vmatprep.subr.bf16.mxu0 %v517
    %577 = vmatpush1.bf16.msra.mxu0 %v516
    %578 = vmatprep.subr.bf16.mxu0 %v521
    %579 = vmatpush1.bf16.msra.mxu0 %v520
    %580 = vmatprep.subr.bf16.mxu0 %v525
    %581 = vmatpush1.bf16.msra.mxu0 %v524
    %582 = vmatprep.subr.bf16.mxu0 %v529
    %583 = vmatpush1.bf16.msra.mxu0 %v528
    %584 = vmatprep.subr.bf16.mxu0 %v533
    %585 = vmatpush1.bf16.msra.mxu0 %v532
    %586 = vmatprep.subr.bf16.mxu0 %v537
    %587 = vmatpush1.bf16.msra.mxu0 %v536
    %588 = vmatprep.subr.bf16.mxu0 0
    %589 = vmatpush1.bf16.msra.mxu0 0
    %590 = vmatprep.subr.bf16.mxu0 0
    %591 = vmatpush1.bf16.msra.mxu0 0
    %592 = vmatprep.subr.bf16.mxu0 0
    %593 = vmatpush1.bf16.msra.mxu0 0
    %594 = vmatprep.subr.bf16.mxu0 0
    %595 = vmatpush1.bf16.msra.mxu0 0
    %596 = vmatprep.subr.bf16.mxu0 0
    %597 = vmatpush1.bf16.msra.mxu0 0
    %598 = vmatprep.subr.bf16.mxu0 0
    %599 = vmatpush1.bf16.msra.mxu0 0
    %600 = vmatprep.subr.bf16.mxu0 0
    %601 = vmatpush1.bf16.msra.mxu0 0
    %602 = vmatprep.subr.bf16.mxu0 0
    %603 = vmatpush1.bf16.msra.mxu0 0
    %604 = vmatprep.mubr.bf16.mxu0 0
    %605 = vmatmul.mubr.bf16.gmra.mrb[0].mxu0 %v379
    %v606 = vpop.f32.mrb[0].mxu0
    %v607 = vadd.f32 0.0, %v606
    %v608 = vpop.f32.mrb[0].mxu0
    %v609 = vadd.f32 0.0, %v608
    %v610 = vpop.f32.mrb[0].mxu0
    %v611 = vpop.f32.mrb[0].mxu0
    %612 = vdwg.mxu0
    %613 = vmatprep.subr.bf16.mxu0 %v511
    %614 = vmatpush1.bf16.msra.mxu0 %v510
    %615 = vmatprep.subr.bf16.mxu0 %v515
    %616 = vmatpush1.bf16.msra.mxu0 %v514
    %617 = vmatprep.subr.bf16.mxu0 %v519
    %618 = vmatpush1.bf16.msra.mxu0 %v518
    %619 = vmatprep.subr.bf16.mxu0 %v523
    %620 = vmatpush1.bf16.msra.mxu0 %v522
    %621 = vmatprep.subr.bf16.mxu0 %v527
    %622 = vmatpush1.bf16.msra.mxu0 %v526
    %623 = vmatprep.subr.bf16.mxu0 %v531
    %624 = vmatpush1.bf16.msra.mxu0 %v530
    %625 = vmatprep.subr.bf16.mxu0 %v535
    %626 = vmatpush1.bf16.msra.mxu0 %v534
    %627 = vmatprep.subr.bf16.mxu0 %v539
    %628 = vmatpush1.bf16.msra.mxu0 %v538
    %629 = vmatprep.subr.bf16.mxu0 0
    %630 = vmatpush1.bf16.msra.mxu0 0
    %631 = vmatprep.subr.bf16.mxu0 0
    %632 = vmatpush1.bf16.msra.mxu0 0
    %633 = vmatprep.subr.bf16.mxu0 0
    %634 = vmatpush1.bf16.msra.mxu0 0
    %635 = vmatprep.subr.bf16.mxu0 0
    %636 = vmatpush1.bf16.msra.mxu0 0
    %637 = vmatprep.subr.bf16.mxu0 0
    %638 = vmatpush1.bf16.msra.mxu0 0
    %639 = vmatprep.subr.bf16.mxu0 0
    %640 = vmatpush1.bf16.msra.mxu0 0
    %641 = vmatprep.subr.bf16.mxu0 0
    %642 = vmatpush1.bf16.msra.mxu0 0
    %643 = vmatprep.subr.bf16.mxu0 0
    %644 = vmatpush1.bf16.msra.mxu0 0
    %645 = vmatprep.mubr.bf16.mxu0 0
    %646 = vmatmul.mubr.bf16.gmra.mrb[0].mxu0 %v379
    %v647 = vpop.f32.mrb[0].mxu0
    %v648 = vadd.f32 0.0, %v647
    %v649 = vpop.f32.mrb[0].mxu0
    %v650 = vadd.f32 0.0, %v649
    %v651 = vpop.f32.mrb[0].mxu0
    %v652 = vpop.f32.mrb[0].mxu0
    %653 = vdwg.mxu0
    %v654 = vadd.f32 %v374, %v607
    %v655 = vadd.f32 %v375, %v609
    %v656 = vadd.f32 %v376, %v648
    %v657 = vadd.f32 %v377, %v650
    %v658 = vxor.u32 %v654, 2147483648
    %v659 = vmul.f32 %v658, 1.442695
    %v660 = vpow.pop %v659
    %v661 = vadd.f32 %v660, 1.0
    %v662 = vrcp.pop %v661
    %v663 = vmul.f32 1.0, %v662
    %v664 = vxor.u32 %v655, 2147483648
    %v665 = vmul.f32 %v664, 1.442695
    %v666 = vpow.pop %v665
    %v667 = vadd.f32 %v666, 1.0
    %v668 = vrcp.pop %v667
    %v669 = vmul.f32 1.0, %v668
    %v670 = vtanh.pop %v656
    %v671 = vxor.u32 %v657, 2147483648
    %v672 = vmul.f32 %v671, 1.442695
    %v673 = vpow.pop %v672
    %v674 = vadd.f32 %v673, 1.0
    %v675 = vrcp.pop %v674
    %v676 = vmul.f32 1.0, %v675
    %v677 = vld [vmem:[#allocation3] sm:$0xff]
    %v678 = vmul.f32 %v669, %v677
    %v679 = vmul.f32 %v663, %v670
    %v680 = vadd.f32 %v678, %v679
    %v681 = vtanh.pop %v680
    %v682 = vmul.f32 %v676, %v681
    %683 = vst [vmem:[#allocation3] sm:$0xff] %v680
    %684 = vst [vmem:[#allocation2] sm:$0xff] %v682
    %s685 = scalar_lea.vmem [#allocation4], 64
    %v686 = vld [vmem:[%s685] sm:$0xff]
    %v687 = vld [vmem:[%s685 + $0x8] sm:$0xff]
    %v688 = vld [vmem:[%s685 + $0x10] sm:$0xff]
    %v689 = vld [vmem:[%s685 + $0x18] sm:$0xff]
    %v690 = vld [vmem:[#allocation2] sm:$0xff]
    %v691 = vpack.c.bf16 %v690, %v690
    %v692 = vld [vmem:[#allocation7] sm:$0xff]
    %v693 = vld [vmem:[#allocation7 + $0x8] sm:$0xff]
    %v694 = vld [vmem:[#allocation7 + $0x10] sm:$0xff]
    %v695 = vld [vmem:[#allocation7 + $0x18] sm:$0xff]
    %v696 = vld [vmem:[#allocation7 + $0x20] sm:$0xff]
    %v697 = vld [vmem:[#allocation7 + $0x28] sm:$0xff]
    %v698 = vld [vmem:[#allocation7 + $0x30] sm:$0xff]
    %v699 = vld [vmem:[#allocation7 + $0x38] sm:$0xff]
    %v700 = vld [vmem:[#allocation7 + $0x40] sm:$0xff]
    %v701 = vld [vmem:[#allocation7 + $0x48] sm:$0xff]
    %v702 = vld [vmem:[#allocation7 + $0x50] sm:$0xff]
    %v703 = vld [vmem:[#allocation7 + $0x58] sm:$0xff]
    %v704 = vld [vmem:[#allocation7 + $0x60] sm:$0xff]
    %v705 = vld [vmem:[#allocation7 + $0x68] sm:$0xff]
    %v706 = vld [vmem:[#allocation7 + $0x70] sm:$0xff]
    %v707 = vld [vmem:[#allocation7 + $0x78] sm:$0xff]
    %v708 = vld [vmem:[#allocation7 + $0x80] sm:$0xff]
    %v709 = vld [vmem:[#allocation7 + $0x88] sm:$0xff]
    %v710 = vld [vmem:[#allocation7 + $0x90] sm:$0xff]
    %v711 = vld [vmem:[#allocation7 + $0x98] sm:$0xff]
    %v712 = vld [vmem:[#allocation7 + $0xa0] sm:$0xff]
    %v713 = vld [vmem:[#allocation7 + $0xa8] sm:$0xff]
    %v714 = vld [vmem:[#allocation7 + $0xb0] sm:$0xff]
    %v715 = vld [vmem:[#allocation7 + $0xb8] sm:$0xff]
    %v716 = vld [vmem:[#allocation7 + $0xc0] sm:$0xff]
    %v717 = vld [vmem:[#allocation7 + $0xc8] sm:$0xff]
    %v718 = vld [vmem:[#allocation7 + $0xd0] sm:$0xff]
    %v719 = vld [vmem:[#allocation7 + $0xd8] sm:$0xff]
    %v720 = vld [vmem:[#allocation7 + $0xe0] sm:$0xff]
    %v721 = vld [vmem:[#allocation7 + $0xe8] sm:$0xff]
    %v722 = vld [vmem:[#allocation7 + $0xf0] sm:$0xff]
    %v723 = vld [vmem:[#allocation7 + $0xf8] sm:$0xff]
    %v756 = vunpack.c.l.b16 %v692
    %v757 = vunpack.c.h.b16 %v692
    %v758 = vunpack.c.l.b16 %v693
    %v759 = vunpack.c.h.b16 %v693
    %v760 = vunpack.c.l.b16 %v694
    %v761 = vunpack.c.h.b16 %v694
    %v762 = vunpack.c.l.b16 %v695
    %v763 = vunpack.c.h.b16 %v695
    %v764 = vunpack.c.l.b16 %v696
    %v765 = vunpack.c.h.b16 %v696
    %v766 = vunpack.c.l.b16 %v697
    %v767 = vunpack.c.h.b16 %v697
    %v768 = vunpack.c.l.b16 %v698
    %v769 = vunpack.c.h.b16 %v698
    %v770 = vunpack.c.l.b16 %v699
    %v771 = vunpack.c.h.b16 %v699
    %v772 = vunpack.c.l.b16 %v700
    %v773 = vunpack.c.h.b16 %v700
    %v774 = vunpack.c.l.b16 %v701
    %v775 = vunpack.c.h.b16 %v701
    %v776 = vunpack.c.l.b16 %v702
    %v777 = vunpack.c.h.b16 %v702
    %v778 = vunpack.c.l.b16 %v703
    %v779 = vunpack.c.h.b16 %v703
    %v780 = vunpack.c.l.b16 %v704
    %v781 = vunpack.c.h.b16 %v704
    %v782 = vunpack.c.l.b16 %v705
    %v783 = vunpack.c.h.b16 %v705
    %v784 = vunpack.c.l.b16 %v706
    %v785 = vunpack.c.h.b16 %v706
    %v786 = vunpack.c.l.b16 %v707
    %v787 = vunpack.c.h.b16 %v707
    %v788 = vunpack.c.l.b16 %v708
    %v789 = vunpack.c.h.b16 %v708
    %v790 = vunpack.c.l.b16 %v709
    %v791 = vunpack.c.h.b16 %v709
    %v792 = vunpack.c.l.b16 %v710
    %v793 = vunpack.c.h.b16 %v710
    %v794 = vunpack.c.l.b16 %v711
    %v795 = vunpack.c.h.b16 %v711
    %v796 = vunpack.c.l.b16 %v712
    %v797 = vunpack.c.h.b16 %v712
    %v798 = vunpack.c.l.b16 %v713
    %v799 = vunpack.c.h.b16 %v713
    %v800 = vunpack.c.l.b16 %v714
    %v801 = vunpack.c.h.b16 %v714
    %v802 = vunpack.c.l.b16 %v715
    %v803 = vunpack.c.h.b16 %v715
    %v804 = vunpack.c.l.b16 %v716
    %v805 = vunpack.c.h.b16 %v716
    %v806 = vunpack.c.l.b16 %v717
    %v807 = vunpack.c.h.b16 %v717
    %v808 = vunpack.c.l.b16 %v718
    %v809 = vunpack.c.h.b16 %v718
    %v810 = vunpack.c.l.b16 %v719
    %v811 = vunpack.c.h.b16 %v719
    %v812 = vunpack.c.l.b16 %v720
    %v813 = vunpack.c.h.b16 %v720
    %v814 = vunpack.c.l.b16 %v721
    %v815 = vunpack.c.h.b16 %v721
    %v816 = vunpack.c.l.b16 %v722
    %v817 = vunpack.c.h.b16 %v722
    %v818 = vunpack.c.l.b16 %v723
    %v819 = vunpack.c.h.b16 %v723
    %v820 = vpack.c.b16 %v760, %v756
    %v821 = vpack.c.b16 %v761, %v757
    %v822 = vpack.c.b16 %v762, %v758
    %v823 = vpack.c.b16 %v763, %v759
    %v824 = vpack.c.b16 %v768, %v764
    %v825 = vpack.c.b16 %v769, %v765
    %v826 = vpack.c.b16 %v770, %v766
    %v827 = vpack.c.b16 %v771, %v767
    %v828 = vpack.c.b16 %v776, %v772
    %v829 = vpack.c.b16 %v777, %v773
    %v830 = vpack.c.b16 %v778, %v774
    %v831 = vpack.c.b16 %v779, %v775
    %v832 = vpack.c.b16 %v784, %v780
    %v833 = vpack.c.b16 %v785, %v781
    %v834 = vpack.c.b16 %v786, %v782
    %v835 = vpack.c.b16 %v787, %v783
    %v836 = vpack.c.b16 %v792, %v788
    %v837 = vpack.c.b16 %v793, %v789
    %v838 = vpack.c.b16 %v794, %v790
    %v839 = vpack.c.b16 %v795, %v791
    %v840 = vpack.c.b16 %v800, %v796
    %v841 = vpack.c.b16 %v801, %v797
    %v842 = vpack.c.b16 %v802, %v798
    %v843 = vpack.c.b16 %v803, %v799
    %v844 = vpack.c.b16 %v808, %v804
    %v845 = vpack.c.b16 %v809, %v805
    %v846 = vpack.c.b16 %v810, %v806
    %v847 = vpack.c.b16 %v811, %v807
    %v848 = vpack.c.b16 %v816, %v812
    %v849 = vpack.c.b16 %v817, %v813
    %v850 = vpack.c.b16 %v818, %v814
    %v851 = vpack.c.b16 %v819, %v815
    %884 = vmatprep.subr.bf16.mxu0 %v821
    %885 = vmatpush1.bf16.msra.mxu0 %v820
    %886 = vmatprep.subr.bf16.mxu0 %v825
    %887 = vmatpush1.bf16.msra.mxu0 %v824
    %888 = vmatprep.subr.bf16.mxu0 %v829
    %889 = vmatpush1.bf16.msra.mxu0 %v828
    %890 = vmatprep.subr.bf16.mxu0 %v833
    %891 = vmatpush1.bf16.msra.mxu0 %v832
    %892 = vmatprep.subr.bf16.mxu0 %v837
    %893 = vmatpush1.bf16.msra.mxu0 %v836
    %894 = vmatprep.subr.bf16.mxu0 %v841
    %895 = vmatpush1.bf16.msra.mxu0 %v840
    %896 = vmatprep.subr.bf16.mxu0 %v845
    %897 = vmatpush1.bf16.msra.mxu0 %v844
    %898 = vmatprep.subr.bf16.mxu0 %v849
    %899 = vmatpush1.bf16.msra.mxu0 %v848
    %900 = vmatprep.subr.bf16.mxu0 0
    %901 = vmatpush1.bf16.msra.mxu0 0
    %902 = vmatprep.subr.bf16.mxu0 0
    %903 = vmatpush1.bf16.msra.mxu0 0
    %904 = vmatprep.subr.bf16.mxu0 0
    %905 = vmatpush1.bf16.msra.mxu0 0
    %906 = vmatprep.subr.bf16.mxu0 0
    %907 = vmatpush1.bf16.msra.mxu0 0
    %908 = vmatprep.subr.bf16.mxu0 0
    %909 = vmatpush1.bf16.msra.mxu0 0
    %910 = vmatprep.subr.bf16.mxu0 0
    %911 = vmatpush1.bf16.msra.mxu0 0
    %912 = vmatprep.subr.bf16.mxu0 0
    %913 = vmatpush1.bf16.msra.mxu0 0
    %914 = vmatprep.subr.bf16.mxu0 0
    %915 = vmatpush1.bf16.msra.mxu0 0
    %916 = vmatprep.mubr.bf16.mxu0 0
    %917 = vmatmul.mubr.bf16.gmra.mrb[0].mxu0 %v691
    %v918 = vpop.f32.mrb[0].mxu0
    %v919 = vadd.f32 0.0, %v918
    %v920 = vpop.f32.mrb[0].mxu0
    %v921 = vadd.f32 0.0, %v920
    %v922 = vpop.f32.mrb[0].mxu0
    %v923 = vpop.f32.mrb[0].mxu0
    %924 = vdwg.mxu0
    %925 = vmatprep.subr.bf16.mxu0 %v823
    %926 = vmatpush1.bf16.msra.mxu0 %v822
    %927 = vmatprep.subr.bf16.mxu0 %v827
    %928 = vmatpush1.bf16.msra.mxu0 %v826
    %929 = vmatprep.subr.bf16.mxu0 %v831
    %930 = vmatpush1.bf16.msra.mxu0 %v830
    %931 = vmatprep.subr.bf16.mxu0 %v835
    %932 = vmatpush1.bf16.msra.mxu0 %v834
    %933 = vmatprep.subr.bf16.mxu0 %v839
    %934 = vmatpush1.bf16.msra.mxu0 %v838
    %935 = vmatprep.subr.bf16.mxu0 %v843
    %936 = vmatpush1.bf16.msra.mxu0 %v842
    %937 = vmatprep.subr.bf16.mxu0 %v847
    %938 = vmatpush1.bf16.msra.mxu0 %v846
    %939 = vmatprep.subr.bf16.mxu0 %v851
    %940 = vmatpush1.bf16.msra.mxu0 %v850
    %941 = vmatprep.subr.bf16.mxu0 0
    %942 = vmatpush1.bf16.msra.mxu0 0
    %943 = vmatprep.subr.bf16.mxu0 0
    %944 = vmatpush1.bf16.msra.mxu0 0
    %945 = vmatprep.subr.bf16.mxu0 0
    %946 = vmatpush1.bf16.msra.mxu0 0
    %947 = vmatprep.subr.bf16.mxu0 0
    %948 = vmatpush1.bf16.msra.mxu0 0
    %949 = vmatprep.subr.bf16.mxu0 0
    %950 = vmatpush1.bf16.msra.mxu0 0
    %951 = vmatprep.subr.bf16.mxu0 0
    %952 = vmatpush1.bf16.msra.mxu0 0
    %953 = vmatprep.subr.bf16.mxu0 0
    %954 = vmatpush1.bf16.msra.mxu0 0
    %955 = vmatprep.subr.bf16.mxu0 0
    %956 = vmatpush1.bf16.msra.mxu0 0
    %957 = vmatprep.mubr.bf16.mxu0 0
    %958 = vmatmul.mubr.bf16.gmra.mrb[0].mxu0 %v691
    %v959 = vpop.f32.mrb[0].mxu0
    %v960 = vadd.f32 0.0, %v959
    %v961 = vpop.f32.mrb[0].mxu0
    %v962 = vadd.f32 0.0, %v961
    %v963 = vpop.f32.mrb[0].mxu0
    %v964 = vpop.f32.mrb[0].mxu0
    %965 = vdwg.mxu0
    %v966 = vadd.f32 %v686, %v919
    %v967 = vadd.f32 %v687, %v921
    %v968 = vadd.f32 %v688, %v960
    %v969 = vadd.f32 %v689, %v962
    %v970 = vxor.u32 %v966, 2147483648
    %v971 = vmul.f32 %v970, 1.442695
    %v972 = vpow.pop %v971
    %v973 = vadd.f32 %v972, 1.0
    %v974 = vrcp.pop %v973
    %v975 = vmul.f32 1.0, %v974
    %v976 = vxor.u32 %v967, 2147483648
    %v977 = vmul.f32 %v976, 1.442695
    %v978 = vpow.pop %v977
    %v979 = vadd.f32 %v978, 1.0
    %v980 = vrcp.pop %v979
    %v981 = vmul.f32 1.0, %v980
    %v982 = vtanh.pop %v968
    %v983 = vxor.u32 %v969, 2147483648
    %v984 = vmul.f32 %v983, 1.442695
    %v985 = vpow.pop %v984
    %v986 = vadd.f32 %v985, 1.0
    %v987 = vrcp.pop %v986
    %v988 = vmul.f32 1.0, %v987
    %v989 = vld [vmem:[#allocation3] sm:$0xff]
    %v990 = vmul.f32 %v981, %v989
    %v991 = vmul.f32 %v975, %v982
    %v992 = vadd.f32 %v990, %v991
    %v993 = vtanh.pop %v992
    %v994 = vmul.f32 %v988, %v993
    %995 = vst [vmem:[#allocation3] sm:$0xff] %v992
    %996 = vst [vmem:[#allocation2] sm:$0xff] %v994
    %s997 = scalar_lea.vmem [#allocation4], 96
    %v998 = vld [vmem:[%s997] sm:$0xff]
    %v999 = vld [vmem:[%s997 + $0x8] sm:$0xff]
    %v1000 = vld [vmem:[%s997 + $0x10] sm:$0xff]
    %v1001 = vld [vmem:[%s997 + $0x18] sm:$0xff]
    %v1002 = vld [vmem:[#allocation2] sm:$0xff]
    %v1003 = vpack.c.bf16 %v1002, %v1002
    %v1004 = vld [vmem:[#allocation7] sm:$0xff]
    %v1005 = vld [vmem:[#allocation7 + $0x8] sm:$0xff]
    %v1006 = vld [vmem:[#allocation7 + $0x10] sm:$0xff]
    %v1007 = vld [vmem:[#allocation7 + $0x18] sm:$0xff]
    %v1008 = vld [vmem:[#allocation7 + $0x20] sm:$0xff]
    %v1009 = vld [vmem:[#allocation7 + $0x28] sm:$0xff]
    %v1010 = vld [vmem:[#allocation7 + $0x30] sm:$0xff]
    %v1011 = vld [vmem:[#allocation7 + $0x38] sm:$0xff]
    %v1012 = vld [vmem:[#allocation7 + $0x40] sm:$0xff]
    %v1013 = vld [vmem:[#allocation7 + $0x48] sm:$0xff]
    %v1014 = vld [vmem:[#allocation7 + $0x50] sm:$0xff]
    %v1015 = vld [vmem:[#allocation7 + $0x58] sm:$0xff]
    %v1016 = vld [vmem:[#allocation7 + $0x60] sm:$0xff]
    %v1017 = vld [vmem:[#allocation7 + $0x68] sm:$0xff]
    %v1018 = vld [vmem:[#allocation7 + $0x70] sm:$0xff]
    %v1019 = vld [vmem:[#allocation7 + $0x78] sm:$0xff]
    %v1020 = vld [vmem:[#allocation7 + $0x80] sm:$0xff]
    %v1021 = vld [vmem:[#allocation7 + $0x88] sm:$0xff]
    %v1022 = vld [vmem:[#allocation7 + $0x90] sm:$0xff]
    %v1023 = vld [vmem:[#allocation7 + $0x98] sm:$0xff]
    %v1024 = vld [vmem:[#allocation7 + $0xa0] sm:$0xff]
    %v1025 = vld [vmem:[#allocation7 + $0xa8] sm:$0xff]
    %v1026 = vld [vmem:[#allocation7 + $0xb0] sm:$0xff]
    %v1027 = vld [vmem:[#allocation7 + $0xb8] sm:$0xff]
    %v1028 = vld [vmem:[#allocation7 + $0xc0] sm:$0xff]
    %v1029 = vld [vmem:[#allocation7 + $0xc8] sm:$0xff]
    %v1030 = vld [vmem:[#allocation7 + $0xd0] sm:$0xff]
    %v1031 = vld [vmem:[#allocation7 + $0xd8] sm:$0xff]
    %v1032 = vld [vmem:[#allocation7 + $0xe0] sm:$0xff]
    %v1033 = vld [vmem:[#allocation7 + $0xe8] sm:$0xff]
    %v1034 = vld [vmem:[#allocation7 + $0xf0] sm:$0xff]
    %v1035 = vld [vmem:[#allocation7 + $0xf8] sm:$0xff]
    %v1068 = vunpack.c.l.b16 %v1004
    %v1069 = vunpack.c.h.b16 %v1004
    %v1070 = vunpack.c.l.b16 %v1005
    %v1071 = vunpack.c.h.b16 %v1005
    %v1072 = vunpack.c.l.b16 %v1006
    %v1073 = vunpack.c.h.b16 %v1006
    %v1074 = vunpack.c.l.b16 %v1007
    %v1075 = vunpack.c.h.b16 %v1007
    %v1076 = vunpack.c.l.b16 %v1008
    %v1077 = vunpack.c.h.b16 %v1008
    %v1078 = vunpack.c.l.b16 %v1009
    %v1079 = vunpack.c.h.b16 %v1009
    %v1080 = vunpack.c.l.b16 %v1010
    %v1081 = vunpack.c.h.b16 %v1010
    %v1082 = vunpack.c.l.b16 %v1011
    %v1083 = vunpack.c.h.b16 %v1011
    %v1084 = vunpack.c.l.b16 %v1012
    %v1085 = vunpack.c.h.b16 %v1012
    %v1086 = vunpack.c.l.b16 %v1013
    %v1087 = vunpack.c.h.b16 %v1013
    %v1088 = vunpack.c.l.b16 %v1014
    %v1089 = vunpack.c.h.b16 %v1014
    %v1090 = vunpack.c.l.b16 %v1015
    %v1091 = vunpack.c.h.b16 %v1015
    %v1092 = vunpack.c.l.b16 %v1016
    %v1093 = vunpack.c.h.b16 %v1016
    %v1094 = vunpack.c.l.b16 %v1017
    %v1095 = vunpack.c.h.b16 %v1017
    %v1096 = vunpack.c.l.b16 %v1018
    %v1097 = vunpack.c.h.b16 %v1018
    %v1098 = vunpack.c.l.b16 %v1019
    %v1099 = vunpack.c.h.b16 %v1019
    %v1100 = vunpack.c.l.b16 %v1020
    %v1101 = vunpack.c.h.b16 %v1020
    %v1102 = vunpack.c.l.b16 %v1021
    %v1103 = vunpack.c.h.b16 %v1021
    %v1104 = vunpack.c.l.b16 %v1022
    %v1105 = vunpack.c.h.b16 %v1022
    %v1106 = vunpack.c.l.b16 %v1023
    %v1107 = vunpack.c.h.b16 %v1023
    %v1108 = vunpack.c.l.b16 %v1024
    %v1109 = vunpack.c.h.b16 %v1024
    %v1110 = vunpack.c.l.b16 %v1025
    %v1111 = vunpack.c.h.b16 %v1025
    %v1112 = vunpack.c.l.b16 %v1026
    %v1113 = vunpack.c.h.b16 %v1026
    %v1114 = vunpack.c.l.b16 %v1027
    %v1115 = vunpack.c.h.b16 %v1027
    %v1116 = vunpack.c.l.b16 %v1028
    %v1117 = vunpack.c.h.b16 %v1028
    %v1118 = vunpack.c.l.b16 %v1029
    %v1119 = vunpack.c.h.b16 %v1029
    %v1120 = vunpack.c.l.b16 %v1030
    %v1121 = vunpack.c.h.b16 %v1030
    %v1122 = vunpack.c.l.b16 %v1031
    %v1123 = vunpack.c.h.b16 %v1031
    %v1124 = vunpack.c.l.b16 %v1032
    %v1125 = vunpack.c.h.b16 %v1032
    %v1126 = vunpack.c.l.b16 %v1033
    %v1127 = vunpack.c.h.b16 %v1033
    %v1128 = vunpack.c.l.b16 %v1034
    %v1129 = vunpack.c.h.b16 %v1034
    %v1130 = vunpack.c.l.b16 %v1035
    %v1131 = vunpack.c.h.b16 %v1035
    %v1132 = vpack.c.b16 %v1072, %v1068
    %v1133 = vpack.c.b16 %v1073, %v1069
    %v1134 = vpack.c.b16 %v1074, %v1070
    %v1135 = vpack.c.b16 %v1075, %v1071
    %v1136 = vpack.c.b16 %v1080, %v1076
    %v1137 = vpack.c.b16 %v1081, %v1077
    %v1138 = vpack.c.b16 %v1082, %v1078
    %v1139 = vpack.c.b16 %v1083, %v1079
    %v1140 = vpack.c.b16 %v1088, %v1084
    %v1141 = vpack.c.b16 %v1089, %v1085
    %v1142 = vpack.c.b16 %v1090, %v1086
    %v1143 = vpack.c.b16 %v1091, %v1087
    %v1144 = vpack.c.b16 %v1096, %v1092
    %v1145 = vpack.c.b16 %v1097, %v1093
    %v1146 = vpack.c.b16 %v1098, %v1094
    %v1147 = vpack.c.b16 %v1099, %v1095
    %v1148 = vpack.c.b16 %v1104, %v1100
    %v1149 = vpack.c.b16 %v1105, %v1101
    %v1150 = vpack.c.b16 %v1106, %v1102
    %v1151 = vpack.c.b16 %v1107, %v1103
    %v1152 = vpack.c.b16 %v1112, %v1108
    %v1153 = vpack.c.b16 %v1113, %v1109
    %v1154 = vpack.c.b16 %v1114, %v1110
    %v1155 = vpack.c.b16 %v1115, %v1111
    %v1156 = vpack.c.b16 %v1120, %v1116
    %v1157 = vpack.c.b16 %v1121, %v1117
    %v1158 = vpack.c.b16 %v1122, %v1118
    %v1159 = vpack.c.b16 %v1123, %v1119
    %v1160 = vpack.c.b16 %v1128, %v1124
    %v1161 = vpack.c.b16 %v1129, %v1125
    %v1162 = vpack.c.b16 %v1130, %v1126
    %v1163 = vpack.c.b16 %v1131, %v1127
    %1196 = vmatprep.subr.bf16.mxu0 %v1133
    %1197 = vmatpush1.bf16.msra.mxu0 %v1132
    %1198 = vmatprep.subr.bf16.mxu0 %v1137
    %1199 = vmatpush1.bf16.msra.mxu0 %v1136
    %1200 = vmatprep.subr.bf16.mxu0 %v1141
    %1201 = vmatpush1.bf16.msra.mxu0 %v1140
    %1202 = vmatprep.subr.bf16.mxu0 %v1145
    %1203 = vmatpush1.bf16.msra.mxu0 %v1144
    %1204 = vmatprep.subr.bf16.mxu0 %v1149
    %1205 = vmatpush1.bf16.msra.mxu0 %v1148
    %1206 = vmatprep.subr.bf16.mxu0 %v1153
    %1207 = vmatpush1.bf16.msra.mxu0 %v1152
    %1208 = vmatprep.subr.bf16.mxu0 %v1157
    %1209 = vmatpush1.bf16.msra.mxu0 %v1156
    %1210 = vmatprep.subr.bf16.mxu0 %v1161
    %1211 = vmatpush1.bf16.msra.mxu0 %v1160
    %1212 = vmatprep.subr.bf16.mxu0 0
    %1213 = vmatpush1.bf16.msra.mxu0 0
    %1214 = vmatprep.subr.bf16.mxu0 0
    %1215 = vmatpush1.bf16.msra.mxu0 0
    %1216 = vmatprep.subr.bf16.mxu0 0
    %1217 = vmatpush1.bf16.msra.mxu0 0
    %1218 = vmatprep.subr.bf16.mxu0 0
    %1219 = vmatpush1.bf16.msra.mxu0 0
    %1220 = vmatprep.subr.bf16.mxu0 0
    %1221 = vmatpush1.bf16.msra.mxu0 0
    %1222 = vmatprep.subr.bf16.mxu0 0
    %1223 = vmatpush1.bf16.msra.mxu0 0
    %1224 = vmatprep.subr.bf16.mxu0 0
    %1225 = vmatpush1.bf16.msra.mxu0 0
    %1226 = vmatprep.subr.bf16.mxu0 0
    %1227 = vmatpush1.bf16.msra.mxu0 0
    %1228 = vmatprep.mubr.bf16.mxu0 0
    %1229 = vmatmul.mubr.bf16.gmra.mrb[0].mxu0 %v1003
    %v1230 = vpop.f32.mrb[0].mxu0
    %v1231 = vadd.f32 0.0, %v1230
    %v1232 = vpop.f32.mrb[0].mxu0
    %v1233 = vadd.f32 0.0, %v1232
    %v1234 = vpop.f32.mrb[0].mxu0
    %v1235 = vpop.f32.mrb[0].mxu0
    %1236 = vdwg.mxu0
    %1237 = vmatprep.subr.bf16.mxu0 %v1135
    %1238 = vmatpush1.bf16.msra.mxu0 %v1134
    %1239 = vmatprep.subr.bf16.mxu0 %v1139
    %1240 = vmatpush1.bf16.msra.mxu0 %v1138
    %1241 = vmatprep.subr.bf16.mxu0 %v1143
    %1242 = vmatpush1.bf16.msra.mxu0 %v1142
    %1243 = vmatprep.subr.bf16.mxu0 %v1147
    %1244 = vmatpush1.bf16.msra.mxu0 %v1146
    %1245 = vmatprep.subr.bf16.mxu0 %v1151
    %1246 = vmatpush1.bf16.msra.mxu0 %v1150
    %1247 = vmatprep.subr.bf16.mxu0 %v1155
    %1248 = vmatpush1.bf16.msra.mxu0 %v1154
    %1249 = vmatprep.subr.bf16.mxu0 %v1159
    %1250 = vmatpush1.bf16.msra.mxu0 %v1158
    %1251 = vmatprep.subr.bf16.mxu0 %v1163
    %1252 = vmatpush1.bf16.msra.mxu0 %v1162
    %1253 = vmatprep.subr.bf16.mxu0 0
    %1254 = vmatpush1.bf16.msra.mxu0 0
    %1255 = vmatprep.subr.bf16.mxu0 0
    %1256 = vmatpush1.bf16.msra.mxu0 0
    %1257 = vmatprep.subr.bf16.mxu0 0
    %1258 = vmatpush1.bf16.msra.mxu0 0
    %1259 = vmatprep.subr.bf16.mxu0 0
    %1260 = vmatpush1.bf16.msra.mxu0 0
    %1261 = vmatprep.subr.bf16.mxu0 0
    %1262 = vmatpush1.bf16.msra.mxu0 0
    %1263 = vmatprep.subr.bf16.mxu0 0
    %1264 = vmatpush1.bf16.msra.mxu0 0
    %1265 = vmatprep.subr.bf16.mxu0 0
    %1266 = vmatpush1.bf16.msra.mxu0 0
    %1267 = vmatprep.subr.bf16.mxu0 0
    %1268 = vmatpush1.bf16.msra.mxu0 0
    %1269 = vmatprep.mubr.bf16.mxu0 0
    %1270 = vmatmul.mubr.bf16.gmra.mrb[0].mxu0 %v1003
    %v1271 = vpop.f32.mrb[0].mxu0
    %v1272 = vadd.f32 0.0, %v1271
    %v1273 = vpop.f32.mrb[0].mxu0
    %v1274 = vadd.f32 0.0, %v1273
    %v1275 = vpop.f32.mrb[0].mxu0
    %v1276 = vpop.f32.mrb[0].mxu0
    %1277 = vdwg.mxu0
    %v1278 = vadd.f32 %v998, %v1231
    %v1279 = vadd.f32 %v999, %v1233
    %v1280 = vadd.f32 %v1000, %v1272
    %v1281 = vadd.f32 %v1001, %v1274
    %v1282 = vxor.u32 %v1278, 2147483648
    %v1283 = vmul.f32 %v1282, 1.442695
    %v1284 = vpow.pop %v1283
    %v1285 = vadd.f32 %v1284, 1.0
    %v1286 = vrcp.pop %v1285
    %v1287 = vmul.f32 1.0, %v1286
    %v1288 = vxor.u32 %v1279, 2147483648
    %v1289 = vmul.f32 %v1288, 1.442695
    %v1290 = vpow.pop %v1289
    %v1291 = vadd.f32 %v1290, 1.0
    %v1292 = vrcp.pop %v1291
    %v1293 = vmul.f32 1.0, %v1292
    %v1294 = vtanh.pop %v1280
    %v1295 = vxor.u32 %v1281, 2147483648
    %v1296 = vmul.f32 %v1295, 1.442695
    %v1297 = vpow.pop %v1296
    %v1298 = vadd.f32 %v1297, 1.0
    %v1299 = vrcp.pop %v1298
    %v1300 = vmul.f32 1.0, %v1299
    %v1301 = vld [vmem:[#allocation3] sm:$0xff]
    %v1302 = vmul.f32 %v1293, %v1301
    %v1303 = vmul.f32 %v1287, %v1294
    %v1304 = vadd.f32 %v1302, %v1303
    %v1305 = vtanh.pop %v1304
    %v1306 = vmul.f32 %v1300, %v1305
    %1307 = vst [vmem:[#allocation3] sm:$0xff] %v1304
    %1308 = vst [vmem:[#allocation2] sm:$0xff] %v1306
    %s1309 = scalar_lea.vmem [#allocation4], 128
    %v1310 = vld [vmem:[%s1309] sm:$0xff]
    %v1311 = vld [vmem:[%s1309 + $0x8] sm:$0xff]
    %v1312 = vld [vmem:[%s1309 + $0x10] sm:$0xff]
    %v1313 = vld [vmem:[%s1309 + $0x18] sm:$0xff]
    %v1314 = vld [vmem:[#allocation2] sm:$0xff]
    %v1315 = vpack.c.bf16 %v1314, %v1314
    %v1316 = vld [vmem:[#allocation7] sm:$0xff]
    %v1317 = vld [vmem:[#allocation7 + $0x8] sm:$0xff]
    %v1318 = vld [vmem:[#allocation7 + $0x10] sm:$0xff]
    %v1319 = vld [vmem:[#allocation7 + $0x18] sm:$0xff]
    %v1320 = vld [vmem:[#allocation7 + $0x20] sm:$0xff]
    %v1321 = vld [vmem:[#allocation7 + $0x28] sm:$0xff]
    %v1322 = vld [vmem:[#allocation7 + $0x30] sm:$0xff]
    %v1323 = vld [vmem:[#allocation7 + $0x38] sm:$0xff]
    %v1324 = vld [vmem:[#allocation7 + $0x40] sm:$0xff]
    %v1325 = vld [vmem:[#allocation7 + $0x48] sm:$0xff]
    %v1326 = vld [vmem:[#allocation7 + $0x50] sm:$0xff]
    %v1327 = vld [vmem:[#allocation7 + $0x58] sm:$0xff]
    %v1328 = vld [vmem:[#allocation7 + $0x60] sm:$0xff]
    %v1329 = vld [vmem:[#allocation7 + $0x68] sm:$0xff]
    %v1330 = vld [vmem:[#allocation7 + $0x70] sm:$0xff]
    %v1331 = vld [vmem:[#allocation7 + $0x78] sm:$0xff]
    %v1332 = vld [vmem:[#allocation7 + $0x80] sm:$0xff]
    %v1333 = vld [vmem:[#allocation7 + $0x88] sm:$0xff]
    %v1334 = vld [vmem:[#allocation7 + $0x90] sm:$0xff]
    %v1335 = vld [vmem:[#allocation7 + $0x98] sm:$0xff]
    %v1336 = vld [vmem:[#allocation7 + $0xa0] sm:$0xff]
    %v1337 = vld [vmem:[#allocation7 + $0xa8] sm:$0xff]
    %v1338 = vld [vmem:[#allocation7 + $0xb0] sm:$0xff]
    %v1339 = vld [vmem:[#allocation7 + $0xb8] sm:$0xff]
    %v1340 = vld [vmem:[#allocation7 + $0xc0] sm:$0xff]
    %v1341 = vld [vmem:[#allocation7 + $0xc8] sm:$0xff]
    %v1342 = vld [vmem:[#allocation7 + $0xd0] sm:$0xff]
    %v1343 = vld [vmem:[#allocation7 + $0xd8] sm:$0xff]
    %v1344 = vld [vmem:[#allocation7 + $0xe0] sm:$0xff]
    %v1345 = vld [vmem:[#allocation7 + $0xe8] sm:$0xff]
    %v1346 = vld [vmem:[#allocation7 + $0xf0] sm:$0xff]
    %v1347 = vld [vmem:[#allocation7 + $0xf8] sm:$0xff]
    %v1380 = vunpack.c.l.b16 %v1316
    %v1381 = vunpack.c.h.b16 %v1316
    %v1382 = vunpack.c.l.b16 %v1317
    %v1383 = vunpack.c.h.b16 %v1317
    %v1384 = vunpack.c.l.b16 %v1318
    %v1385 = vunpack.c.h.b16 %v1318
    %v1386 = vunpack.c.l.b16 %v1319
    %v1387 = vunpack.c.h.b16 %v1319
    %v1388 = vunpack.c.l.b16 %v1320
    %v1389 = vunpack.c.h.b16 %v1320
    %v1390 = vunpack.c.l.b16 %v1321
    %v1391 = vunpack.c.h.b16 %v1321
    %v1392 = vunpack.c.l.b16 %v1322
    %v1393 = vunpack.c.h.b16 %v1322
    %v1394 = vunpack.c.l.b16 %v1323
    %v1395 = vunpack.c.h.b16 %v1323
    %v1396 = vunpack.c.l.b16 %v1324
    %v1397 = vunpack.c.h.b16 %v1324
    %v1398 = vunpack.c.l.b16 %v1325
    %v1399 = vunpack.c.h.b16 %v1325
    %v1400 = vunpack.c.l.b16 %v1326
    %v1401 = vunpack.c.h.b16 %v1326
    %v1402 = vunpack.c.l.b16 %v1327
    %v1403 = vunpack.c.h.b16 %v1327
    %v1404 = vunpack.c.l.b16 %v1328
    %v1405 = vunpack.c.h.b16 %v1328
    %v1406 = vunpack.c.l.b16 %v1329
    %v1407 = vunpack.c.h.b16 %v1329
    %v1408 = vunpack.c.l.b16 %v1330
    %v1409 = vunpack.c.h.b16 %v1330
    %v1410 = vunpack.c.l.b16 %v1331
    %v1411 = vunpack.c.h.b16 %v1331
    %v1412 = vunpack.c.l.b16 %v1332
    %v1413 = vunpack.c.h.b16 %v1332
    %v1414 = vunpack.c.l.b16 %v1333
    %v1415 = vunpack.c.h.b16 %v1333
    %v1416 = vunpack.c.l.b16 %v1334
    %v1417 = vunpack.c.h.b16 %v1334
    %v1418 = vunpack.c.l.b16 %v1335
    %v1419 = vunpack.c.h.b16 %v1335
    %v1420 = vunpack.c.l.b16 %v1336
    %v1421 = vunpack.c.h.b16 %v1336
    %v1422 = vunpack.c.l.b16 %v1337
    %v1423 = vunpack.c.h.b16 %v1337
    %v1424 = vunpack.c.l.b16 %v1338
    %v1425 = vunpack.c.h.b16 %v1338
    %v1426 = vunpack.c.l.b16 %v1339
    %v1427 = vunpack.c.h.b16 %v1339
    %v1428 = vunpack.c.l.b16 %v1340
    %v1429 = vunpack.c.h.b16 %v1340
    %v1430 = vunpack.c.l.b16 %v1341
    %v1431 = vunpack.c.h.b16 %v1341
    %v1432 = vunpack.c.l.b16 %v1342
    %v1433 = vunpack.c.h.b16 %v1342
    %v1434 = vunpack.c.l.b16 %v1343
    %v1435 = vunpack.c.h.b16 %v1343
    %v1436 = vunpack.c.l.b16 %v1344
    %v1437 = vunpack.c.h.b16 %v1344
    %v1438 = vunpack.c.l.b16 %v1345
    %v1439 = vunpack.c.h.b16 %v1345
    %v1440 = vunpack.c.l.b16 %v1346
    %v1441 = vunpack.c.h.b16 %v1346
    %v1442 = vunpack.c.l.b16 %v1347
    %v1443 = vunpack.c.h.b16 %v1347
    %v1444 = vpack.c.b16 %v1384, %v1380
    %v1445 = vpack.c.b16 %v1385, %v1381
    %v1446 = vpack.c.b16 %v1386, %v1382
    %v1447 = vpack.c.b16 %v1387, %v1383
    %v1448 = vpack.c.b16 %v1392, %v1388
    %v1449 = vpack.c.b16 %v1393, %v1389
    %v1450 = vpack.c.b16 %v1394, %v1390
    %v1451 = vpack.c.b16 %v1395, %v1391
    %v1452 = vpack.c.b16 %v1400, %v1396
    %v1453 = vpack.c.b16 %v1401, %v1397
    %v1454 = vpack.c.b16 %v1402, %v1398
    %v1455 = vpack.c.b16 %v1403, %v1399
    %v1456 = vpack.c.b16 %v1408, %v1404
    %v1457 = vpack.c.b16 %v1409, %v1405
    %v1458 = vpack.c.b16 %v1410, %v1406
    %v1459 = vpack.c.b16 %v1411, %v1407
    %v1460 = vpack.c.b16 %v1416, %v1412
    %v1461 = vpack.c.b16 %v1417, %v1413
    %v1462 = vpack.c.b16 %v1418, %v1414
    %v1463 = vpack.c.b16 %v1419, %v1415
    %v1464 = vpack.c.b16 %v1424, %v1420
    %v1465 = vpack.c.b16 %v1425, %v1421
    %v1466 = vpack.c.b16 %v1426, %v1422
    %v1467 = vpack.c.b16 %v1427, %v1423
    %v1468 = vpack.c.b16 %v1432, %v1428
    %v1469 = vpack.c.b16 %v1433, %v1429
    %v1470 = vpack.c.b16 %v1434, %v1430
    %v1471 = vpack.c.b16 %v1435, %v1431
    %v1472 = vpack.c.b16 %v1440, %v1436
    %v1473 = vpack.c.b16 %v1441, %v1437
    %v1474 = vpack.c.b16 %v1442, %v1438
    %v1475 = vpack.c.b16 %v1443, %v1439
    %1508 = vmatprep.subr.bf16.mxu0 %v1445
    %1509 = vmatpush1.bf16.msra.mxu0 %v1444
    %1510 = vmatprep.subr.bf16.mxu0 %v1449
    %1511 = vmatpush1.bf16.msra.mxu0 %v1448
    %1512 = vmatprep.subr.bf16.mxu0 %v1453
    %1513 = vmatpush1.bf16.msra.mxu0 %v1452
    %1514 = vmatprep.subr.bf16.mxu0 %v1457
    %1515 = vmatpush1.bf16.msra.mxu0 %v1456
    %1516 = vmatprep.subr.bf16.mxu0 %v1461
    %1517 = vmatpush1.bf16.msra.mxu0 %v1460
    %1518 = vmatprep.subr.bf16.mxu0 %v1465
    %1519 = vmatpush1.bf16.msra.mxu0 %v1464
    %1520 = vmatprep.subr.bf16.mxu0 %v1469
    %1521 = vmatpush1.bf16.msra.mxu0 %v1468
    %1522 = vmatprep.subr.bf16.mxu0 %v1473
    %1523 = vmatpush1.bf16.msra.mxu0 %v1472
    %1524 = vmatprep.subr.bf16.mxu0 0
    %1525 = vmatpush1.bf16.msra.mxu0 0
    %1526 = vmatprep.subr.bf16.mxu0 0
    %1527 = vmatpush1.bf16.msra.mxu0 0
    %1528 = vmatprep.subr.bf16.mxu0 0
    %1529 = vmatpush1.bf16.msra.mxu0 0
    %1530 = vmatprep.subr.bf16.mxu0 0
    %1531 = vmatpush1.bf16.msra.mxu0 0
    %1532 = vmatprep.subr.bf16.mxu0 0
    %1533 = vmatpush1.bf16.msra.mxu0 0
    %1534 = vmatprep.subr.bf16.mxu0 0
    %1535 = vmatpush1.bf16.msra.mxu0 0
    %1536 = vmatprep.subr.bf16.mxu0 0
    %1537 = vmatpush1.bf16.msra.mxu0 0
    %1538 = vmatprep.subr.bf16.mxu0 0
    %1539 = vmatpush1.bf16.msra.mxu0 0
    %1540 = vmatprep.mubr.bf16.mxu0 0
    %1541 = vmatmul.mubr.bf16.gmra.mrb[0].mxu0 %v1315
    %v1542 = vpop.f32.mrb[0].mxu0
    %v1543 = vadd.f32 0.0, %v1542
    %v1544 = vpop.f32.mrb[0].mxu0
    %v1545 = vadd.f32 0.0, %v1544
    %v1546 = vpop.f32.mrb[0].mxu0
    %v1547 = vpop.f32.mrb[0].mxu0
    %1548 = vdwg.mxu0
    %1549 = vmatprep.subr.bf16.mxu0 %v1447
    %1550 = vmatpush1.bf16.msra.mxu0 %v1446
    %1551 = vmatprep.subr.bf16.mxu0 %v1451
    %1552 = vmatpush1.bf16.msra.mxu0 %v1450
    %1553 = vmatprep.subr.bf16.mxu0 %v1455
    %1554 = vmatpush1.bf16.msra.mxu0 %v1454
    %1555 = vmatprep.subr.bf16.mxu0 %v1459
    %1556 = vmatpush1.bf16.msra.mxu0 %v1458
    %1557 = vmatprep.subr.bf16.mxu0 %v1463
    %1558 = vmatpush1.bf16.msra.mxu0 %v1462
    %1559 = vmatprep.subr.bf16.mxu0 %v1467
    %1560 = vmatpush1.bf16.msra.mxu0 %v1466
    %1561 = vmatprep.subr.bf16.mxu0 %v1471
    %1562 = vmatpush1.bf16.msra.mxu0 %v1470
    %1563 = vmatprep.subr.bf16.mxu0 %v1475
    %1564 = vmatpush1.bf16.msra.mxu0 %v1474
    %1565 = vmatprep.subr.bf16.mxu0 0
    %1566 = vmatpush1.bf16.msra.mxu0 0
    %1567 = vmatprep.subr.bf16.mxu0 0
    %1568 = vmatpush1.bf16.msra.mxu0 0
    %1569 = vmatprep.subr.bf16.mxu0 0
    %1570 = vmatpush1.bf16.msra.mxu0 0
    %1571 = vmatprep.subr.bf16.mxu0 0
    %1572 = vmatpush1.bf16.msra.mxu0 0
    %1573 = vmatprep.subr.bf16.mxu0 0
    %1574 = vmatpush1.bf16.msra.mxu0 0
    %1575 = vmatprep.subr.bf16.mxu0 0
    %1576 = vmatpush1.bf16.msra.mxu0 0
    %1577 = vmatprep.subr.bf16.mxu0 0
    %1578 = vmatpush1.bf16.msra.mxu0 0
    %1579 = vmatprep.subr.bf16.mxu0 0
    %1580 = vmatpush1.bf16.msra.mxu0 0
    %1581 = vmatprep.mubr.bf16.mxu0 0
    %1582 = vmatmul.mubr.bf16.gmra.mrb[0].mxu0 %v1315
    %v1583 = vpop.f32.mrb[0].mxu0
    %v1584 = vadd.f32 0.0, %v1583
    %v1585 = vpop.f32.mrb[0].mxu0
    %v1586 = vadd.f32 0.0, %v1585
    %v1587 = vpop.f32.mrb[0].mxu0
    %v1588 = vpop.f32.mrb[0].mxu0
    %1589 = vdwg.mxu0
    %v1590 = vadd.f32 %v1310, %v1543
    %v1591 = vadd.f32 %v1311, %v1545
    %v1592 = vadd.f32 %v1312, %v1584
    %v1593 = vadd.f32 %v1313, %v1586
    %v1594 = vxor.u32 %v1590, 2147483648
    %v1595 = vmul.f32 %v1594, 1.442695
    %v1596 = vpow.pop %v1595
    %v1597 = vadd.f32 %v1596, 1.0
    %v1598 = vrcp.pop %v1597
    %v1599 = vmul.f32 1.0, %v1598
    %v1600 = vxor.u32 %v1591, 2147483648
    %v1601 = vmul.f32 %v1600, 1.442695
    %v1602 = vpow.pop %v1601
    %v1603 = vadd.f32 %v1602, 1.0
    %v1604 = vrcp.pop %v1603
    %v1605 = vmul.f32 1.0, %v1604
    %v1606 = vtanh.pop %v1592
    %v1607 = vxor.u32 %v1593, 2147483648
    %v1608 = vmul.f32 %v1607, 1.442695
    %v1609 = vpow.pop %v1608
    %v1610 = vadd.f32 %v1609, 1.0
    %v1611 = vrcp.pop %v1610
    %v1612 = vmul.f32 1.0, %v1611
    %v1613 = vld [vmem:[#allocation3] sm:$0xff]
    %v1614 = vmul.f32 %v1605, %v1613
    %v1615 = vmul.f32 %v1599, %v1606
    %v1616 = vadd.f32 %v1614, %v1615
    %v1617 = vtanh.pop %v1616
    %v1618 = vmul.f32 %v1612, %v1617
    %1619 = vst [vmem:[#allocation3] sm:$0xff] %v1616
    %1620 = vst [vmem:[#allocation2] sm:$0xff] %v1618
    %s1621 = scalar_lea.vmem [#allocation4], 160
    %v1622 = vld [vmem:[%s1621] sm:$0xff]
    %v1623 = vld [vmem:[%s1621 + $0x8] sm:$0xff]
    %v1624 = vld [vmem:[%s1621 + $0x10] sm:$0xff]
    %v1625 = vld [vmem:[%s1621 + $0x18] sm:$0xff]
    %v1626 = vld [vmem:[#allocation2] sm:$0xff]
    %v1627 = vpack.c.bf16 %v1626, %v1626
    %v1628 = vld [vmem:[#allocation7] sm:$0xff]
    %v1629 = vld [vmem:[#allocation7 + $0x8] sm:$0xff]
    %v1630 = vld [vmem:[#allocation7 + $0x10] sm:$0xff]
    %v1631 = vld [vmem:[#allocation7 + $0x18] sm:$0xff]
    %v1632 = vld [vmem:[#allocation7 + $0x20] sm:$0xff]
    %v1633 = vld [vmem:[#allocation7 + $0x28] sm:$0xff]
    %v1634 = vld [vmem:[#allocation7 + $0x30] sm:$0xff]
    %v1635 = vld [vmem:[#allocation7 + $0x38] sm:$0xff]
    %v1636 = vld [vmem:[#allocation7 + $0x40] sm:$0xff]
    %v1637 = vld [vmem:[#allocation7 + $0x48] sm:$0xff]
    %v1638 = vld [vmem:[#allocation7 + $0x50] sm:$0xff]
    %v1639 = vld [vmem:[#allocation7 + $0x58] sm:$0xff]
    %v1640 = vld [vmem:[#allocation7 + $0x60] sm:$0xff]
    %v1641 = vld [vmem:[#allocation7 + $0x68] sm:$0xff]
    %v1642 = vld [vmem:[#allocation7 + $0x70] sm:$0xff]
    %v1643 = vld [vmem:[#allocation7 + $0x78] sm:$0xff]
    %v1644 = vld [vmem:[#allocation7 + $0x80] sm:$0xff]
    %v1645 = vld [vmem:[#allocation7 + $0x88] sm:$0xff]
    %v1646 = vld [vmem:[#allocation7 + $0x90] sm:$0xff]
    %v1647 = vld [vmem:[#allocation7 + $0x98] sm:$0xff]
    %v1648 = vld [vmem:[#allocation7 + $0xa0] sm:$0xff]
    %v1649 = vld [vmem:[#allocation7 + $0xa8] sm:$0xff]
    %v1650 = vld [vmem:[#allocation7 + $0xb0] sm:$0xff]
    %v1651 = vld [vmem:[#allocation7 + $0xb8] sm:$0xff]
    %v1652 = vld [vmem:[#allocation7 + $0xc0] sm:$0xff]
    %v1653 = vld [vmem:[#allocation7 + $0xc8] sm:$0xff]
    %v1654 = vld [vmem:[#allocation7 + $0xd0] sm:$0xff]
    %v1655 = vld [vmem:[#allocation7 + $0xd8] sm:$0xff]
    %v1656 = vld [vmem:[#allocation7 + $0xe0] sm:$0xff]
    %v1657 = vld [vmem:[#allocation7 + $0xe8] sm:$0xff]
    %v1658 = vld [vmem:[#allocation7 + $0xf0] sm:$0xff]
    %v1659 = vld [vmem:[#allocation7 + $0xf8] sm:$0xff]
    %v1692 = vunpack.c.l.b16 %v1628
    %v1693 = vunpack.c.h.b16 %v1628
    %v1694 = vunpack.c.l.b16 %v1629
    %v1695 = vunpack.c.h.b16 %v1629
    %v1696 = vunpack.c.l.b16 %v1630
    %v1697 = vunpack.c.h.b16 %v1630
    %v1698 = vunpack.c.l.b16 %v1631
    %v1699 = vunpack.c.h.b16 %v1631
    %v1700 = vunpack.c.l.b16 %v1632
    %v1701 = vunpack.c.h.b16 %v1632
    %v1702 = vunpack.c.l.b16 %v1633
    %v1703 = vunpack.c.h.b16 %v1633
    %v1704 = vunpack.c.l.b16 %v1634
    %v1705 = vunpack.c.h.b16 %v1634
    %v1706 = vunpack.c.l.b16 %v1635
    %v1707 = vunpack.c.h.b16 %v1635
    %v1708 = vunpack.c.l.b16 %v1636
    %v1709 = vunpack.c.h.b16 %v1636
    %v1710 = vunpack.c.l.b16 %v1637
    %v1711 = vunpack.c.h.b16 %v1637
    %v1712 = vunpack.c.l.b16 %v1638
    %v1713 = vunpack.c.h.b16 %v1638
    %v1714 = vunpack.c.l.b16 %v1639
    %v1715 = vunpack.c.h.b16 %v1639
    %v1716 = vunpack.c.l.b16 %v1640
    %v1717 = vunpack.c.h.b16 %v1640
    %v1718 = vunpack.c.l.b16 %v1641
    %v1719 = vunpack.c.h.b16 %v1641
    %v1720 = vunpack.c.l.b16 %v1642
    %v1721 = vunpack.c.h.b16 %v1642
    %v1722 = vunpack.c.l.b16 %v1643
    %v1723 = vunpack.c.h.b16 %v1643
    %v1724 = vunpack.c.l.b16 %v1644
    %v1725 = vunpack.c.h.b16 %v1644
    %v1726 = vunpack.c.l.b16 %v1645
    %v1727 = vunpack.c.h.b16 %v1645
    %v1728 = vunpack.c.l.b16 %v1646
    %v1729 = vunpack.c.h.b16 %v1646
    %v1730 = vunpack.c.l.b16 %v1647
    %v1731 = vunpack.c.h.b16 %v1647
    %v1732 = vunpack.c.l.b16 %v1648
    %v1733 = vunpack.c.h.b16 %v1648
    %v1734 = vunpack.c.l.b16 %v1649
    %v1735 = vunpack.c.h.b16 %v1649
    %v1736 = vunpack.c.l.b16 %v1650
    %v1737 = vunpack.c.h.b16 %v1650
    %v1738 = vunpack.c.l.b16 %v1651
    %v1739 = vunpack.c.h.b16 %v1651
    %v1740 = vunpack.c.l.b16 %v1652
    %v1741 = vunpack.c.h.b16 %v1652
    %v1742 = vunpack.c.l.b16 %v1653
    %v1743 = vunpack.c.h.b16 %v1653
    %v1744 = vunpack.c.l.b16 %v1654
    %v1745 = vunpack.c.h.b16 %v1654
    %v1746 = vunpack.c.l.b16 %v1655
    %v1747 = vunpack.c.h.b16 %v1655
    %v1748 = vunpack.c.l.b16 %v1656
    %v1749 = vunpack.c.h.b16 %v1656
    %v1750 = vunpack.c.l.b16 %v1657
    %v1751 = vunpack.c.h.b16 %v1657
    %v1752 = vunpack.c.l.b16 %v1658
    %v1753 = vunpack.c.h.b16 %v1658
    %v1754 = vunpack.c.l.b16 %v1659
    %v1755 = vunpack.c.h.b16 %v1659
    %v1756 = vpack.c.b16 %v1696, %v1692
    %v1757 = vpack.c.b16 %v1697, %v1693
    %v1758 = vpack.c.b16 %v1698, %v1694
    %v1759 = vpack.c.b16 %v1699, %v1695
    %v1760 = vpack.c.b16 %v1704, %v1700
    %v1761 = vpack.c.b16 %v1705, %v1701
    %v1762 = vpack.c.b16 %v1706, %v1702
    %v1763 = vpack.c.b16 %v1707, %v1703
    %v1764 = vpack.c.b16 %v1712, %v1708
    %v1765 = vpack.c.b16 %v1713, %v1709
    %v1766 = vpack.c.b16 %v1714, %v1710
    %v1767 = vpack.c.b16 %v1715, %v1711
    %v1768 = vpack.c.b16 %v1720, %v1716
    %v1769 = vpack.c.b16 %v1721, %v1717
    %v1770 = vpack.c.b16 %v1722, %v1718
    %v1771 = vpack.c.b16 %v1723, %v1719
    %v1772 = vpack.c.b16 %v1728, %v1724
    %v1773 = vpack.c.b16 %v1729, %v1725
    %v1774 = vpack.c.b16 %v1730, %v1726
    %v1775 = vpack.c.b16 %v1731, %v1727
    %v1776 = vpack.c.b16 %v1736, %v1732
    %v1777 = vpack.c.b16 %v1737, %v1733
    %v1778 = vpack.c.b16 %v1738, %v1734
    %v1779 = vpack.c.b16 %v1739, %v1735
    %v1780 = vpack.c.b16 %v1744, %v1740
    %v1781 = vpack.c.b16 %v1745, %v1741
    %v1782 = vpack.c.b16 %v1746, %v1742
    %v1783 = vpack.c.b16 %v1747, %v1743
    %v1784 = vpack.c.b16 %v1752, %v1748
    %v1785 = vpack.c.b16 %v1753, %v1749
    %v1786 = vpack.c.b16 %v1754, %v1750
    %v1787 = vpack.c.b16 %v1755, %v1751
    %1820 = vmatprep.subr.bf16.mxu0 %v1757
    %1821 = vmatpush1.bf16.msra.mxu0 %v1756
    %1822 = vmatprep.subr.bf16.mxu0 %v1761
    %1823 = vmatpush1.bf16.msra.mxu0 %v1760
    %1824 = vmatprep.subr.bf16.mxu0 %v1765
    %1825 = vmatpush1.bf16.msra.mxu0 %v1764
    %1826 = vmatprep.subr.bf16.mxu0 %v1769
    %1827 = vmatpush1.bf16.msra.mxu0 %v1768
    %1828 = vmatprep.subr.bf16.mxu0 %v1773
    %1829 = vmatpush1.bf16.msra.mxu0 %v1772
    %1830 = vmatprep.subr.bf16.mxu0 %v1777
    %1831 = vmatpush1.bf16.msra.mxu0 %v1776
    %1832 = vmatprep.subr.bf16.mxu0 %v1781
    %1833 = vmatpush1.bf16.msra.mxu0 %v1780
    %1834 = vmatprep.subr.bf16.mxu0 %v1785
    %1835 = vmatpush1.bf16.msra.mxu0 %v1784
    %1836 = vmatprep.subr.bf16.mxu0 0
    %1837 = vmatpush1.bf16.msra.mxu0 0
    %1838 = vmatprep.subr.bf16.mxu0 0
    %1839 = vmatpush1.bf16.msra.mxu0 0
    %1840 = vmatprep.subr.bf16.mxu0 0
    %1841 = vmatpush1.bf16.msra.mxu0 0
    %1842 = vmatprep.subr.bf16.mxu0 0
    %1843 = vmatpush1.bf16.msra.mxu0 0
    %1844 = vmatprep.subr.bf16.mxu0 0
    %1845 = vmatpush1.bf16.msra.mxu0 0
    %1846 = vmatprep.subr.bf16.mxu0 0
    %1847 = vmatpush1.bf16.msra.mxu0 0
    %1848 = vmatprep.subr.bf16.mxu0 0
    %1849 = vmatpush1.bf16.msra.mxu0 0
    %1850 = vmatprep.subr.bf16.mxu0 0
    %1851 = vmatpush1.bf16.msra.mxu0 0
    %1852 = vmatprep.mubr.bf16.mxu0 0
    %1853 = vmatmul.mubr.bf16.gmra.mrb[0].mxu0 %v1627
    %v1854 = vpop.f32.mrb[0].mxu0
    %v1855 = vadd.f32 0.0, %v1854
    %v1856 = vpop.f32.mrb[0].mxu0
    %v1857 = vadd.f32 0.0, %v1856
    %v1858 = vpop.f32.mrb[0].mxu0
    %v1859 = vpop.f32.mrb[0].mxu0
    %1860 = vdwg.mxu0
    %1861 = vmatprep.subr.bf16.mxu0 %v1759
    %1862 = vmatpush1.bf16.msra.mxu0 %v1758
    %1863 = vmatprep.subr.bf16.mxu0 %v1763
    %1864 = vmatpush1.bf16.msra.mxu0 %v1762
    %1865 = vmatprep.subr.bf16.mxu0 %v1767
    %1866 = vmatpush1.bf16.msra.mxu0 %v1766
    %1867 = vmatprep.subr.bf16.mxu0 %v1771
    %1868 = vmatpush1.bf16.msra.mxu0 %v1770
    %1869 = vmatprep.subr.bf16.mxu0 %v1775
    %1870 = vmatpush1.bf16.msra.mxu0 %v1774
    %1871 = vmatprep.subr.bf16.mxu0 %v1779
    %1872 = vmatpush1.bf16.msra.mxu0 %v1778
    %1873 = vmatprep.subr.bf16.mxu0 %v1783
    %1874 = vmatpush1.bf16.msra.mxu0 %v1782
    %1875 = vmatprep.subr.bf16.mxu0 %v1787
    %1876 = vmatpush1.bf16.msra.mxu0 %v1786
    %1877 = vmatprep.subr.bf16.mxu0 0
    %1878 = vmatpush1.bf16.msra.mxu0 0
    %1879 = vmatprep.subr.bf16.mxu0 0
    %1880 = vmatpush1.bf16.msra.mxu0 0
    %1881 = vmatprep.subr.bf16.mxu0 0
    %1882 = vmatpush1.bf16.msra.mxu0 0
    %1883 = vmatprep.subr.bf16.mxu0 0
    %1884 = vmatpush1.bf16.msra.mxu0 0
    %1885 = vmatprep.subr.bf16.mxu0 0
    %1886 = vmatpush1.bf16.msra.mxu0 0
    %1887 = vmatprep.subr.bf16.mxu0 0
    %1888 = vmatpush1.bf16.msra.mxu0 0
    %1889 = vmatprep.subr.bf16.mxu0 0
    %1890 = vmatpush1.bf16.msra.mxu0 0
    %1891 = vmatprep.subr.bf16.mxu0 0
    %1892 = vmatpush1.bf16.msra.mxu0 0
    %1893 = vmatprep.mubr.bf16.mxu0 0
    %1894 = vmatmul.mubr.bf16.gmra.mrb[0].mxu0 %v1627
    %v1895 = vpop.f32.mrb[0].mxu0
    %v1896 = vadd.f32 0.0, %v1895
    %v1897 = vpop.f32.mrb[0].mxu0
    %v1898 = vadd.f32 0.0, %v1897
    %v1899 = vpop.f32.mrb[0].mxu0
    %v1900 = vpop.f32.mrb[0].mxu0
    %1901 = vdwg.mxu0
    %v1902 = vadd.f32 %v1622, %v1855
    %v1903 = vadd.f32 %v1623, %v1857
    %v1904 = vadd.f32 %v1624, %v1896
    %v1905 = vadd.f32 %v1625, %v1898
    %v1906 = vxor.u32 %v1902, 2147483648
    %v1907 = vmul.f32 %v1906, 1.442695
    %v1908 = vpow.pop %v1907
    %v1909 = vadd.f32 %v1908, 1.0
    %v1910 = vrcp.pop %v1909
    %v1911 = vmul.f32 1.0, %v1910
    %v1912 = vxor.u32 %v1903, 2147483648
    %v1913 = vmul.f32 %v1912, 1.442695
    %v1914 = vpow.pop %v1913
    %v1915 = vadd.f32 %v1914, 1.0
    %v1916 = vrcp.pop %v1915
    %v1917 = vmul.f32 1.0, %v1916
    %v1918 = vtanh.pop %v1904
    %v1919 = vxor.u32 %v1905, 2147483648
    %v1920 = vmul.f32 %v1919, 1.442695
    %v1921 = vpow.pop %v1920
    %v1922 = vadd.f32 %v1921, 1.0
    %v1923 = vrcp.pop %v1922
    %v1924 = vmul.f32 1.0, %v1923
    %v1925 = vld [vmem:[#allocation3] sm:$0xff]
    %v1926 = vmul.f32 %v1917, %v1925
    %v1927 = vmul.f32 %v1911, %v1918
    %v1928 = vadd.f32 %v1926, %v1927
    %v1929 = vtanh.pop %v1928
    %v1930 = vmul.f32 %v1924, %v1929
    %1931 = vst [vmem:[#allocation3] sm:$0xff] %v1928
    %1932 = vst [vmem:[#allocation2] sm:$0xff] %v1930
    %s1933 = scalar_lea.vmem [#allocation4], 192
    %v1934 = vld [vmem:[%s1933] sm:$0xff]
    %v1935 = vld [vmem:[%s1933 + $0x8] sm:$0xff]
    %v1936 = vld [vmem:[%s1933 + $0x10] sm:$0xff]
    %v1937 = vld [vmem:[%s1933 + $0x18] sm:$0xff]
    %v1938 = vld [vmem:[#allocation2] sm:$0xff]
    %v1939 = vpack.c.bf16 %v1938, %v1938
    %v1940 = vld [vmem:[#allocation7] sm:$0xff]
    %v1941 = vld [vmem:[#allocation7 + $0x8] sm:$0xff]
    %v1942 = vld [vmem:[#allocation7 + $0x10] sm:$0xff]
    %v1943 = vld [vmem:[#allocation7 + $0x18] sm:$0xff]
    %v1944 = vld [vmem:[#allocation7 + $0x20] sm:$0xff]
    %v1945 = vld [vmem:[#allocation7 + $0x28] sm:$0xff]
    %v1946 = vld [vmem:[#allocation7 + $0x30] sm:$0xff]
    %v1947 = vld [vmem:[#allocation7 + $0x38] sm:$0xff]
    %v1948 = vld [vmem:[#allocation7 + $0x40] sm:$0xff]
    %v1949 = vld [vmem:[#allocation7 + $0x48] sm:$0xff]
    %v1950 = vld [vmem:[#allocation7 + $0x50] sm:$0xff]
    %v1951 = vld [vmem:[#allocation7 + $0x58] sm:$0xff]
    %v1952 = vld [vmem:[#allocation7 + $0x60] sm:$0xff]
    %v1953 = vld [vmem:[#allocation7 + $0x68] sm:$0xff]
    %v1954 = vld [vmem:[#allocation7 + $0x70] sm:$0xff]
    %v1955 = vld [vmem:[#allocation7 + $0x78] sm:$0xff]
    %v1956 = vld [vmem:[#allocation7 + $0x80] sm:$0xff]
    %v1957 = vld [vmem:[#allocation7 + $0x88] sm:$0xff]
    %v1958 = vld [vmem:[#allocation7 + $0x90] sm:$0xff]
    %v1959 = vld [vmem:[#allocation7 + $0x98] sm:$0xff]
    %v1960 = vld [vmem:[#allocation7 + $0xa0] sm:$0xff]
    %v1961 = vld [vmem:[#allocation7 + $0xa8] sm:$0xff]
    %v1962 = vld [vmem:[#allocation7 + $0xb0] sm:$0xff]
    %v1963 = vld [vmem:[#allocation7 + $0xb8] sm:$0xff]
    %v1964 = vld [vmem:[#allocation7 + $0xc0] sm:$0xff]
    %v1965 = vld [vmem:[#allocation7 + $0xc8] sm:$0xff]
    %v1966 = vld [vmem:[#allocation7 + $0xd0] sm:$0xff]
    %v1967 = vld [vmem:[#allocation7 + $0xd8] sm:$0xff]
    %v1968 = vld [vmem:[#allocation7 + $0xe0] sm:$0xff]
    %v1969 = vld [vmem:[#allocation7 + $0xe8] sm:$0xff]
    %v1970 = vld [vmem:[#allocation7 + $0xf0] sm:$0xff]
    %v1971 = vld [vmem:[#allocation7 + $0xf8] sm:$0xff]
    %v2004 = vunpack.c.l.b16 %v1940
    %v2005 = vunpack.c.h.b16 %v1940
    %v2006 = vunpack.c.l.b16 %v1941
    %v2007 = vunpack.c.h.b16 %v1941
    %v2008 = vunpack.c.l.b16 %v1942
    %v2009 = vunpack.c.h.b16 %v1942
    %v2010 = vunpack.c.l.b16 %v1943
    %v2011 = vunpack.c.h.b16 %v1943
    %v2012 = vunpack.c.l.b16 %v1944
    %v2013 = vunpack.c.h.b16 %v1944
    %v2014 = vunpack.c.l.b16 %v1945
    %v2015 = vunpack.c.h.b16 %v1945
    %v2016 = vunpack.c.l.b16 %v1946
    %v2017 = vunpack.c.h.b16 %v1946
    %v2018 = vunpack.c.l.b16 %v1947
    %v2019 = vunpack.c.h.b16 %v1947
    %v2020 = vunpack.c.l.b16 %v1948
    %v2021 = vunpack.c.h.b16 %v1948
    %v2022 = vunpack.c.l.b16 %v1949
    %v2023 = vunpack.c.h.b16 %v1949
    %v2024 = vunpack.c.l.b16 %v1950
    %v2025 = vunpack.c.h.b16 %v1950
    %v2026 = vunpack.c.l.b16 %v1951
    %v2027 = vunpack.c.h.b16 %v1951
    %v2028 = vunpack.c.l.b16 %v1952
    %v2029 = vunpack.c.h.b16 %v1952
    %v2030 = vunpack.c.l.b16 %v1953
    %v2031 = vunpack.c.h.b16 %v1953
    %v2032 = vunpack.c.l.b16 %v1954
    %v2033 = vunpack.c.h.b16 %v1954
    %v2034 = vunpack.c.l.b16 %v1955
    %v2035 = vunpack.c.h.b16 %v1955
    %v2036 = vunpack.c.l.b16 %v1956
    %v2037 = vunpack.c.h.b16 %v1956
    %v2038 = vunpack.c.l.b16 %v1957
    %v2039 = vunpack.c.h.b16 %v1957
    %v2040 = vunpack.c.l.b16 %v1958
    %v2041 = vunpack.c.h.b16 %v1958
    %v2042 = vunpack.c.l.b16 %v1959
    %v2043 = vunpack.c.h.b16 %v1959
    %v2044 = vunpack.c.l.b16 %v1960
    %v2045 = vunpack.c.h.b16 %v1960
    %v2046 = vunpack.c.l.b16 %v1961
    %v2047 = vunpack.c.h.b16 %v1961
    %v2048 = vunpack.c.l.b16 %v1962
    %v2049 = vunpack.c.h.b16 %v1962
    %v2050 = vunpack.c.l.b16 %v1963
    %v2051 = vunpack.c.h.b16 %v1963
    %v2052 = vunpack.c.l.b16 %v1964
    %v2053 = vunpack.c.h.b16 %v1964
    %v2054 = vunpack.c.l.b16 %v1965
    %v2055 = vunpack.c.h.b16 %v1965
    %v2056 = vunpack.c.l.b16 %v1966
    %v2057 = vunpack.c.h.b16 %v1966
    %v2058 = vunpack.c.l.b16 %v1967
    %v2059 = vunpack.c.h.b16 %v1967
    %v2060 = vunpack.c.l.b16 %v1968
    %v2061 = vunpack.c.h.b16 %v1968
    %v2062 = vunpack.c.l.b16 %v1969
    %v2063 = vunpack.c.h.b16 %v1969
    %v2064 = vunpack.c.l.b16 %v1970
    %v2065 = vunpack.c.h.b16 %v1970
    %v2066 = vunpack.c.l.b16 %v1971
    %v2067 = vunpack.c.h.b16 %v1971
    %v2068 = vpack.c.b16 %v2008, %v2004
    %v2069 = vpack.c.b16 %v2009, %v2005
    %v2070 = vpack.c.b16 %v2010, %v2006
    %v2071 = vpack.c.b16 %v2011, %v2007
    %v2072 = vpack.c.b16 %v2016, %v2012
    %v2073 = vpack.c.b16 %v2017, %v2013
    %v2074 = vpack.c.b16 %v2018, %v2014
    %v2075 = vpack.c.b16 %v2019, %v2015
    %v2076 = vpack.c.b16 %v2024, %v2020
    %v2077 = vpack.c.b16 %v2025, %v2021
    %v2078 = vpack.c.b16 %v2026, %v2022
    %v2079 = vpack.c.b16 %v2027, %v2023
    %v2080 = vpack.c.b16 %v2032, %v2028
    %v2081 = vpack.c.b16 %v2033, %v2029
    %v2082 = vpack.c.b16 %v2034, %v2030
    %v2083 = vpack.c.b16 %v2035, %v2031
    %v2084 = vpack.c.b16 %v2040, %v2036
    %v2085 = vpack.c.b16 %v2041, %v2037
    %v2086 = vpack.c.b16 %v2042, %v2038
    %v2087 = vpack.c.b16 %v2043, %v2039
    %v2088 = vpack.c.b16 %v2048, %v2044
    %v2089 = vpack.c.b16 %v2049, %v2045
    %v2090 = vpack.c.b16 %v2050, %v2046
    %v2091 = vpack.c.b16 %v2051, %v2047
    %v2092 = vpack.c.b16 %v2056, %v2052
    %v2093 = vpack.c.b16 %v2057, %v2053
    %v2094 = vpack.c.b16 %v2058, %v2054
    %v2095 = vpack.c.b16 %v2059, %v2055
    %v2096 = vpack.c.b16 %v2064, %v2060
    %v2097 = vpack.c.b16 %v2065, %v2061
    %v2098 = vpack.c.b16 %v2066, %v2062
    %v2099 = vpack.c.b16 %v2067, %v2063
    %2132 = vmatprep.subr.bf16.mxu0 %v2069
    %2133 = vmatpush1.bf16.msra.mxu0 %v2068
    %2134 = vmatprep.subr.bf16.mxu0 %v2073
    %2135 = vmatpush1.bf16.msra.mxu0 %v2072
    %2136 = vmatprep.subr.bf16.mxu0 %v2077
    %2137 = vmatpush1.bf16.msra.mxu0 %v2076
    %2138 = vmatprep.subr.bf16.mxu0 %v2081
    %2139 = vmatpush1.bf16.msra.mxu0 %v2080
    %2140 = vmatprep.subr.bf16.mxu0 %v2085
    %2141 = vmatpush1.bf16.msra.mxu0 %v2084
    %2142 = vmatprep.subr.bf16.mxu0 %v2089
    %2143 = vmatpush1.bf16.msra.mxu0 %v2088
    %2144 = vmatprep.subr.bf16.mxu0 %v2093
    %2145 = vmatpush1.bf16.msra.mxu0 %v2092
    %2146 = vmatprep.subr.bf16.mxu0 %v2097
    %2147 = vmatpush1.bf16.msra.mxu0 %v2096
    %2148 = vmatprep.subr.bf16.mxu0 0
    %2149 = vmatpush1.bf16.msra.mxu0 0
    %2150 = vmatprep.subr.bf16.mxu0 0
    %2151 = vmatpush1.bf16.msra.mxu0 0
    %2152 = vmatprep.subr.bf16.mxu0 0
    %2153 = vmatpush1.bf16.msra.mxu0 0
    %2154 = vmatprep.subr.bf16.mxu0 0
    %2155 = vmatpush1.bf16.msra.mxu0 0
    %2156 = vmatprep.subr.bf16.mxu0 0
    %2157 = vmatpush1.bf16.msra.mxu0 0
    %2158 = vmatprep.subr.bf16.mxu0 0
    %2159 = vmatpush1.bf16.msra.mxu0 0
    %2160 = vmatprep.subr.bf16.mxu0 0
    %2161 = vmatpush1.bf16.msra.mxu0 0
    %2162 = vmatprep.subr.bf16.mxu0 0
    %2163 = vmatpush1.bf16.msra.mxu0 0
    %2164 = vmatprep.mubr.bf16.mxu0 0
    %2165 = vmatmul.mubr.bf16.gmra.mrb[0].mxu0 %v1939
    %v2166 = vpop.f32.mrb[0].mxu0
    %v2167 = vadd.f32 0.0, %v2166
    %v2168 = vpop.f32.mrb[0].mxu0
    %v2169 = vadd.f32 0.0, %v2168
    %v2170 = vpop.f32.mrb[0].mxu0
    %v2171 = vpop.f32.mrb[0].mxu0
    %2172 = vdwg.mxu0
    %2173 = vmatprep.subr.bf16.mxu0 %v2071
    %2174 = vmatpush1.bf16.msra.mxu0 %v2070
    %2175 = vmatprep.subr.bf16.mxu0 %v2075
    %2176 = vmatpush1.bf16.msra.mxu0 %v2074
    %2177 = vmatprep.subr.bf16.mxu0 %v2079
    %2178 = vmatpush1.bf16.msra.mxu0 %v2078
    %2179 = vmatprep.subr.bf16.mxu0 %v2083
    %2180 = vmatpush1.bf16.msra.mxu0 %v2082
    %2181 = vmatprep.subr.bf16.mxu0 %v2087
    %2182 = vmatpush1.bf16.msra.mxu0 %v2086
    %2183 = vmatprep.subr.bf16.mxu0 %v2091
    %2184 = vmatpush1.bf16.msra.mxu0 %v2090
    %2185 = vmatprep.subr.bf16.mxu0 %v2095
    %2186 = vmatpush1.bf16.msra.mxu0 %v2094
    %2187 = vmatprep.subr.bf16.mxu0 %v2099
    %2188 = vmatpush1.bf16.msra.mxu0 %v2098
    %2189 = vmatprep.subr.bf16.mxu0 0
    %2190 = vmatpush1.bf16.msra.mxu0 0
    %2191 = vmatprep.subr.bf16.mxu0 0
    %2192 = vmatpush1.bf16.msra.mxu0 0
    %2193 = vmatprep.subr.bf16.mxu0 0
    %2194 = vmatpush1.bf16.msra.mxu0 0
    %2195 = vmatprep.subr.bf16.mxu0 0
    %2196 = vmatpush1.bf16.msra.mxu0 0
    %2197 = vmatprep.subr.bf16.mxu0 0
    %2198 = vmatpush1.bf16.msra.mxu0 0
    %2199 = vmatprep.subr.bf16.mxu0 0
    %2200 = vmatpush1.bf16.msra.mxu0 0
    %2201 = vmatprep.subr.bf16.mxu0 0
    %2202 = vmatpush1.bf16.msra.mxu0 0
    %2203 = vmatprep.subr.bf16.mxu0 0
    %2204 = vmatpush1.bf16.msra.mxu0 0
    %2205 = vmatprep.mubr.bf16.mxu0 0
    %2206 = vmatmul.mubr.bf16.gmra.mrb[0].mxu0 %v1939
    %v2207 = vpop.f32.mrb[0].mxu0
    %v2208 = vadd.f32 0.0, %v2207
    %v2209 = vpop.f32.mrb[0].mxu0
    %v2210 = vadd.f32 0.0, %v2209
    %v2211 = vpop.f32.mrb[0].mxu0
    %v2212 = vpop.f32.mrb[0].mxu0
    %2213 = vdwg.mxu0
    %v2214 = vadd.f32 %v1934, %v2167
    %v2215 = vadd.f32 %v1935, %v2169
    %v2216 = vadd.f32 %v1936, %v2208
    %v2217 = vadd.f32 %v1937, %v2210
    %v2218 = vxor.u32 %v2214, 2147483648
    %v2219 = vmul.f32 %v2218, 1.442695
    %v2220 = vpow.pop %v2219
    %v2221 = vadd.f32 %v2220, 1.0
    %v2222 = vrcp.pop %v2221
    %v2223 = vmul.f32 1.0, %v2222
    %v2224 = vxor.u32 %v2215, 2147483648
    %v2225 = vmul.f32 %v2224, 1.442695
    %v2226 = vpow.pop %v2225
    %v2227 = vadd.f32 %v2226, 1.0
    %v2228 = vrcp.pop %v2227
    %v2229 = vmul.f32 1.0, %v2228
    %v2230 = vtanh.pop %v2216
    %v2231 = vxor.u32 %v2217, 2147483648
    %v2232 = vmul.f32 %v2231, 1.442695
    %v2233 = vpow.pop %v2232
    %v2234 = vadd.f32 %v2233, 1.0
    %v2235 = vrcp.pop %v2234
    %v2236 = vmul.f32 1.0, %v2235
    %v2237 = vld [vmem:[#allocation3] sm:$0xff]
    %v2238 = vmul.f32 %v2229, %v2237
    %v2239 = vmul.f32 %v2223, %v2230
    %v2240 = vadd.f32 %v2238, %v2239
    %v2241 = vtanh.pop %v2240
    %v2242 = vmul.f32 %v2236, %v2241
    %2243 = vst [vmem:[#allocation3] sm:$0xff] %v2240
    %2244 = vst [vmem:[#allocation2] sm:$0xff] %v2242
    %s2245 = scalar_lea.vmem [#allocation4], 224
    %v2246 = vld [vmem:[%s2245] sm:$0xff]
    %v2247 = vld [vmem:[%s2245 + $0x8] sm:$0xff]
    %v2248 = vld [vmem:[%s2245 + $0x10] sm:$0xff]
    %v2249 = vld [vmem:[%s2245 + $0x18] sm:$0xff]
    %v2250 = vld [vmem:[#allocation2] sm:$0xff]
    %v2251 = vpack.c.bf16 %v2250, %v2250
    %v2252 = vld [vmem:[#allocation7] sm:$0xff]
    %v2253 = vld [vmem:[#allocation7 + $0x8] sm:$0xff]
    %v2254 = vld [vmem:[#allocation7 + $0x10] sm:$0xff]
    %v2255 = vld [vmem:[#allocation7 + $0x18] sm:$0xff]
    %v2256 = vld [vmem:[#allocation7 + $0x20] sm:$0xff]
    %v2257 = vld [vmem:[#allocation7 + $0x28] sm:$0xff]
    %v2258 = vld [vmem:[#allocation7 + $0x30] sm:$0xff]
    %v2259 = vld [vmem:[#allocation7 + $0x38] sm:$0xff]
    %v2260 = vld [vmem:[#allocation7 + $0x40] sm:$0xff]
    %v2261 = vld [vmem:[#allocation7 + $0x48] sm:$0xff]
    %v2262 = vld [vmem:[#allocation7 + $0x50] sm:$0xff]
    %v2263 = vld [vmem:[#allocation7 + $0x58] sm:$0xff]
    %v2264 = vld [vmem:[#allocation7 + $0x60] sm:$0xff]
    %v2265 = vld [vmem:[#allocation7 + $0x68] sm:$0xff]
    %v2266 = vld [vmem:[#allocation7 + $0x70] sm:$0xff]
    %v2267 = vld [vmem:[#allocation7 + $0x78] sm:$0xff]
    %v2268 = vld [vmem:[#allocation7 + $0x80] sm:$0xff]
    %v2269 = vld [vmem:[#allocation7 + $0x88] sm:$0xff]
    %v2270 = vld [vmem:[#allocation7 + $0x90] sm:$0xff]
    %v2271 = vld [vmem:[#allocation7 + $0x98] sm:$0xff]
    %v2272 = vld [vmem:[#allocation7 + $0xa0] sm:$0xff]
    %v2273 = vld [vmem:[#allocation7 + $0xa8] sm:$0xff]
    %v2274 = vld [vmem:[#allocation7 + $0xb0] sm:$0xff]
    %v2275 = vld [vmem:[#allocation7 + $0xb8] sm:$0xff]
    %v2276 = vld [vmem:[#allocation7 + $0xc0] sm:$0xff]
    %v2277 = vld [vmem:[#allocation7 + $0xc8] sm:$0xff]
    %v2278 = vld [vmem:[#allocation7 + $0xd0] sm:$0xff]
    %v2279 = vld [vmem:[#allocation7 + $0xd8] sm:$0xff]
    %v2280 = vld [vmem:[#allocation7 + $0xe0] sm:$0xff]
    %v2281 = vld [vmem:[#allocation7 + $0xe8] sm:$0xff]
    %v2282 = vld [vmem:[#allocation7 + $0xf0] sm:$0xff]
    %v2283 = vld [vmem:[#allocation7 + $0xf8] sm:$0xff]
    %v2316 = vunpack.c.l.b16 %v2252
    %v2317 = vunpack.c.h.b16 %v2252
    %v2318 = vunpack.c.l.b16 %v2253
    %v2319 = vunpack.c.h.b16 %v2253
    %v2320 = vunpack.c.l.b16 %v2254
    %v2321 = vunpack.c.h.b16 %v2254
    %v2322 = vunpack.c.l.b16 %v2255
    %v2323 = vunpack.c.h.b16 %v2255
    %v2324 = vunpack.c.l.b16 %v2256
    %v2325 = vunpack.c.h.b16 %v2256
    %v2326 = vunpack.c.l.b16 %v2257
    %v2327 = vunpack.c.h.b16 %v2257
    %v2328 = vunpack.c.l.b16 %v2258
    %v2329 = vunpack.c.h.b16 %v2258
    %v2330 = vunpack.c.l.b16 %v2259
    %v2331 = vunpack.c.h.b16 %v2259
    %v2332 = vunpack.c.l.b16 %v2260
    %v2333 = vunpack.c.h.b16 %v2260
    %v2334 = vunpack.c.l.b16 %v2261
    %v2335 = vunpack.c.h.b16 %v2261
    %v2336 = vunpack.c.l.b16 %v2262
    %v2337 = vunpack.c.h.b16 %v2262
    %v2338 = vunpack.c.l.b16 %v2263
    %v2339 = vunpack.c.h.b16 %v2263
    %v2340 = vunpack.c.l.b16 %v2264
    %v2341 = vunpack.c.h.b16 %v2264
    %v2342 = vunpack.c.l.b16 %v2265
    %v2343 = vunpack.c.h.b16 %v2265
    %v2344 = vunpack.c.l.b16 %v2266
    %v2345 = vunpack.c.h.b16 %v2266
    %v2346 = vunpack.c.l.b16 %v2267
    %v2347 = vunpack.c.h.b16 %v2267
    %v2348 = vunpack.c.l.b16 %v2268
    %v2349 = vunpack.c.h.b16 %v2268
    %v2350 = vunpack.c.l.b16 %v2269
    %v2351 = vunpack.c.h.b16 %v2269
    %v2352 = vunpack.c.l.b16 %v2270
    %v2353 = vunpack.c.h.b16 %v2270
    %v2354 = vunpack.c.l.b16 %v2271
    %v2355 = vunpack.c.h.b16 %v2271
    %v2356 = vunpack.c.l.b16 %v2272
    %v2357 = vunpack.c.h.b16 %v2272
    %v2358 = vunpack.c.l.b16 %v2273
    %v2359 = vunpack.c.h.b16 %v2273
    %v2360 = vunpack.c.l.b16 %v2274
    %v2361 = vunpack.c.h.b16 %v2274
    %v2362 = vunpack.c.l.b16 %v2275
    %v2363 = vunpack.c.h.b16 %v2275
    %v2364 = vunpack.c.l.b16 %v2276
    %v2365 = vunpack.c.h.b16 %v2276
    %v2366 = vunpack.c.l.b16 %v2277
    %v2367 = vunpack.c.h.b16 %v2277
    %v2368 = vunpack.c.l.b16 %v2278
    %v2369 = vunpack.c.h.b16 %v2278
    %v2370 = vunpack.c.l.b16 %v2279
    %v2371 = vunpack.c.h.b16 %v2279
    %v2372 = vunpack.c.l.b16 %v2280
    %v2373 = vunpack.c.h.b16 %v2280
    %v2374 = vunpack.c.l.b16 %v2281
    %v2375 = vunpack.c.h.b16 %v2281
    %v2376 = vunpack.c.l.b16 %v2282
    %v2377 = vunpack.c.h.b16 %v2282
    %v2378 = vunpack.c.l.b16 %v2283
    %v2379 = vunpack.c.h.b16 %v2283
    %v2380 = vpack.c.b16 %v2320, %v2316
    %v2381 = vpack.c.b16 %v2321, %v2317
    %v2382 = vpack.c.b16 %v2322, %v2318
    %v2383 = vpack.c.b16 %v2323, %v2319
    %v2384 = vpack.c.b16 %v2328, %v2324
    %v2385 = vpack.c.b16 %v2329, %v2325
    %v2386 = vpack.c.b16 %v2330, %v2326
    %v2387 = vpack.c.b16 %v2331, %v2327
    %v2388 = vpack.c.b16 %v2336, %v2332
    %v2389 = vpack.c.b16 %v2337, %v2333
    %v2390 = vpack.c.b16 %v2338, %v2334
    %v2391 = vpack.c.b16 %v2339, %v2335
    %v2392 = vpack.c.b16 %v2344, %v2340
    %v2393 = vpack.c.b16 %v2345, %v2341
    %v2394 = vpack.c.b16 %v2346, %v2342
    %v2395 = vpack.c.b16 %v2347, %v2343
    %v2396 = vpack.c.b16 %v2352, %v2348
    %v2397 = vpack.c.b16 %v2353, %v2349
    %v2398 = vpack.c.b16 %v2354, %v2350
    %v2399 = vpack.c.b16 %v2355, %v2351
    %v2400 = vpack.c.b16 %v2360, %v2356
    %v2401 = vpack.c.b16 %v2361, %v2357
    %v2402 = vpack.c.b16 %v2362, %v2358
    %v2403 = vpack.c.b16 %v2363, %v2359
    %v2404 = vpack.c.b16 %v2368, %v2364
    %v2405 = vpack.c.b16 %v2369, %v2365
    %v2406 = vpack.c.b16 %v2370, %v2366
    %v2407 = vpack.c.b16 %v2371, %v2367
    %v2408 = vpack.c.b16 %v2376, %v2372
    %v2409 = vpack.c.b16 %v2377, %v2373
    %v2410 = vpack.c.b16 %v2378, %v2374
    %v2411 = vpack.c.b16 %v2379, %v2375
    %2444 = vmatprep.subr.bf16.mxu0 %v2381
    %2445 = vmatpush1.bf16.msra.mxu0 %v2380
    %2446 = vmatprep.subr.bf16.mxu0 %v2385
    %2447 = vmatpush1.bf16.msra.mxu0 %v2384
    %2448 = vmatprep.subr.bf16.mxu0 %v2389
    %2449 = vmatpush1.bf16.msra.mxu0 %v2388
    %2450 = vmatprep.subr.bf16.mxu0 %v2393
    %2451 = vmatpush1.bf16.msra.mxu0 %v2392
    %2452 = vmatprep.subr.bf16.mxu0 %v2397
    %2453 = vmatpush1.bf16.msra.mxu0 %v2396
    %2454 = vmatprep.subr.bf16.mxu0 %v2401
    %2455 = vmatpush1.bf16.msra.mxu0 %v2400
    %2456 = vmatprep.subr.bf16.mxu0 %v2405
    %2457 = vmatpush1.bf16.msra.mxu0 %v2404
    %2458 = vmatprep.subr.bf16.mxu0 %v2409
    %2459 = vmatpush1.bf16.msra.mxu0 %v2408
    %2460 = vmatprep.subr.bf16.mxu0 0
    %2461 = vmatpush1.bf16.msra.mxu0 0
    %2462 = vmatprep.subr.bf16.mxu0 0
    %2463 = vmatpush1.bf16.msra.mxu0 0
    %2464 = vmatprep.subr.bf16.mxu0 0
    %2465 = vmatpush1.bf16.msra.mxu0 0
    %2466 = vmatprep.subr.bf16.mxu0 0
    %2467 = vmatpush1.bf16.msra.mxu0 0
    %2468 = vmatprep.subr.bf16.mxu0 0
    %2469 = vmatpush1.bf16.msra.mxu0 0
    %2470 = vmatprep.subr.bf16.mxu0 0
    %2471 = vmatpush1.bf16.msra.mxu0 0
    %2472 = vmatprep.subr.bf16.mxu0 0
    %2473 = vmatpush1.bf16.msra.mxu0 0
    %2474 = vmatprep.subr.bf16.mxu0 0
    %2475 = vmatpush1.bf16.msra.mxu0 0
    %2476 = vmatprep.mubr.bf16.mxu0 0
    %2477 = vmatmul.mubr.bf16.gmra.mrb[0].mxu0 %v2251
    %v2478 = vpop.f32.mrb[0].mxu0
    %v2479 = vadd.f32 0.0, %v2478
    %v2480 = vpop.f32.mrb[0].mxu0
    %v2481 = vadd.f32 0.0, %v2480
    %v2482 = vpop.f32.mrb[0].mxu0
    %v2483 = vpop.f32.mrb[0].mxu0
    %2484 = vdwg.mxu0
    %2485 = vmatprep.subr.bf16.mxu0 %v2383
    %2486 = vmatpush1.bf16.msra.mxu0 %v2382
    %2487 = vmatprep.subr.bf16.mxu0 %v2387
    %2488 = vmatpush1.bf16.msra.mxu0 %v2386
    %2489 = vmatprep.subr.bf16.mxu0 %v2391
    %2490 = vmatpush1.bf16.msra.mxu0 %v2390
    %2491 = vmatprep.subr.bf16.mxu0 %v2395
    %2492 = vmatpush1.bf16.msra.mxu0 %v2394
    %2493 = vmatprep.subr.bf16.mxu0 %v2399
    %2494 = vmatpush1.bf16.msra.mxu0 %v2398
    %2495 = vmatprep.subr.bf16.mxu0 %v2403
    %2496 = vmatpush1.bf16.msra.mxu0 %v2402
    %2497 = vmatprep.subr.bf16.mxu0 %v2407
    %2498 = vmatpush1.bf16.msra.mxu0 %v2406
    %2499 = vmatprep.subr.bf16.mxu0 %v2411
    %2500 = vmatpush1.bf16.msra.mxu0 %v2410
    %2501 = vmatprep.subr.bf16.mxu0 0
    %2502 = vmatpush1.bf16.msra.mxu0 0
    %2503 = vmatprep.subr.bf16.mxu0 0
    %2504 = vmatpush1.bf16.msra.mxu0 0
    %2505 = vmatprep.subr.bf16.mxu0 0
    %2506 = vmatpush1.bf16.msra.mxu0 0
    %2507 = vmatprep.subr.bf16.mxu0 0
    %2508 = vmatpush1.bf16.msra.mxu0 0
    %2509 = vmatprep.subr.bf16.mxu0 0
    %2510 = vmatpush1.bf16.msra.mxu0 0
    %2511 = vmatprep.subr.bf16.mxu0 0
    %2512 = vmatpush1.bf16.msra.mxu0 0
    %2513 = vmatprep.subr.bf16.mxu0 0
    %2514 = vmatpush1.bf16.msra.mxu0 0
    %2515 = vmatprep.subr.bf16.mxu0 0
    %2516 = vmatpush1.bf16.msra.mxu0 0
    %2517 = vmatprep.mubr.bf16.mxu0 0
    %2518 = vmatmul.mubr.bf16.gmra.mrb[0].mxu0 %v2251
    %v2519 = vpop.f32.mrb[0].mxu0
    %v2520 = vadd.f32 0.0, %v2519
    %v2521 = vpop.f32.mrb[0].mxu0
    %v2522 = vadd.f32 0.0, %v2521
    %v2523 = vpop.f32.mrb[0].mxu0
    %v2524 = vpop.f32.mrb[0].mxu0
    %2525 = vdwg.mxu0
    %v2526 = vadd.f32 %v2246, %v2479
    %v2527 = vadd.f32 %v2247, %v2481
    %v2528 = vadd.f32 %v2248, %v2520
    %v2529 = vadd.f32 %v2249, %v2522
    %v2530 = vxor.u32 %v2526, 2147483648
    %v2531 = vmul.f32 %v2530, 1.442695
    %v2532 = vpow.pop %v2531
    %v2533 = vadd.f32 %v2532, 1.0
    %v2534 = vrcp.pop %v2533
    %v2535 = vmul.f32 1.0, %v2534
    %v2536 = vxor.u32 %v2527, 2147483648
    %v2537 = vmul.f32 %v2536, 1.442695
    %v2538 = vpow.pop %v2537
    %v2539 = vadd.f32 %v2538, 1.0
    %v2540 = vrcp.pop %v2539
    %v2541 = vmul.f32 1.0, %v2540
    %v2542 = vtanh.pop %v2528
    %v2543 = vxor.u32 %v2529, 2147483648
    %v2544 = vmul.f32 %v2543, 1.442695
    %v2545 = vpow.pop %v2544
    %v2546 = vadd.f32 %v2545, 1.0
    %v2547 = vrcp.pop %v2546
    %v2548 = vmul.f32 1.0, %v2547
    %v2549 = vld [vmem:[#allocation3] sm:$0xff]
    %v2550 = vmul.f32 %v2541, %v2549
    %v2551 = vmul.f32 %v2535, %v2542
    %v2552 = vadd.f32 %v2550, %v2551
    %v2553 = vtanh.pop %v2552
    %v2554 = vmul.f32 %v2548, %v2553
    %2555 = vst [vmem:[#allocation3] sm:$0xff] %v2552
    %2556 = vst [vmem:[#allocation2] sm:$0xff] %v2554
    %v2557 = vld [vmem:[#allocation2] sm:$0xff]
    %v2558 = vpack.c.bf16 %v2557, %v2557
    %v2559 = vld [vmem:[#allocation9] sm:$0xf]
    %v2560 = vld [vmem:[#allocation9 + $0x4] sm:$0xf]
    %v2561 = vld [vmem:[#allocation9 + $0x8] sm:$0xf]
    %v2562 = vld [vmem:[#allocation9 + $0xc] sm:$0xf]
    %v2563 = vld [vmem:[#allocation9 + $0x10] sm:$0xf]
    %v2564 = vld [vmem:[#allocation9 + $0x14] sm:$0xf]
    %v2565 = vld [vmem:[#allocation9 + $0x18] sm:$0xf]
    %v2566 = vld [vmem:[#allocation9 + $0x1c] sm:$0xf]
    %v2567 = vld [vmem:[#allocation9 + $0x20] sm:$0xf]
    %v2568 = vld [vmem:[#allocation9 + $0x24] sm:$0xf]
    %v2569 = vld [vmem:[#allocation9 + $0x28] sm:$0xf]
    %v2570 = vld [vmem:[#allocation9 + $0x2c] sm:$0xf]
    %v2571 = vld [vmem:[#allocation9 + $0x30] sm:$0xf]
    %v2572 = vld [vmem:[#allocation9 + $0x34] sm:$0xf]
    %v2573 = vld [vmem:[#allocation9 + $0x38] sm:$0xf]
    %v2574 = vld [vmem:[#allocation9 + $0x3c] sm:$0xf]
    %v2575 = vld [vmem:[%s3] sm:$0x1]
    %v2577 = vlaneseq
    %v2578 = vshrl.u32 %v2577, 7
    %v2579 = vsub.s32 0, %v2578
    %v2580 = vrot.slane %v2575, %v2579
    %v2598 = vunpack.c.l.b16 %v2559
    %v2599 = vunpack.c.l.b16 %v2560
    %v2600 = vunpack.c.l.b16 %v2561
    %v2601 = vunpack.c.l.b16 %v2562
    %v2602 = vunpack.c.l.b16 %v2563
    %v2603 = vunpack.c.l.b16 %v2564
    %v2604 = vunpack.c.l.b16 %v2565
    %v2605 = vunpack.c.l.b16 %v2566
    %v2606 = vunpack.c.l.b16 %v2567
    %v2607 = vunpack.c.l.b16 %v2568
    %v2608 = vunpack.c.l.b16 %v2569
    %v2609 = vunpack.c.l.b16 %v2570
    %v2610 = vunpack.c.l.b16 %v2571
    %v2611 = vunpack.c.l.b16 %v2572
    %v2612 = vunpack.c.l.b16 %v2573
    %v2613 = vunpack.c.l.b16 %v2574
    %v2614 = vpack.c.b16 %v2599, %v2598
    %v2615 = vpack.c.b16 %v2601, %v2600
    %v2616 = vpack.c.b16 %v2603, %v2602
    %v2617 = vpack.c.b16 %v2605, %v2604
    %v2618 = vpack.c.b16 %v2607, %v2606
    %v2619 = vpack.c.b16 %v2609, %v2608
    %v2620 = vpack.c.b16 %v2611, %v2610
    %v2621 = vpack.c.b16 %v2613, %v2612
    %2630 = vmatprep.subr.bf16.mxu0 0
    %2631 = vmatpush1.bf16.msra.mxu0 %v2614
    %2632 = vmatprep.subr.bf16.mxu0 0
    %2633 = vmatpush1.bf16.msra.mxu0 %v2615
    %2634 = vmatprep.subr.bf16.mxu0 0
    %2635 = vmatpush1.bf16.msra.mxu0 %v2616
    %2636 = vmatprep.subr.bf16.mxu0 0
    %2637 = vmatpush1.bf16.msra.mxu0 %v2617
    %2638 = vmatprep.subr.bf16.mxu0 0
    %2639 = vmatpush1.bf16.msra.mxu0 %v2618
    %2640 = vmatprep.subr.bf16.mxu0 0
    %2641 = vmatpush1.bf16.msra.mxu0 %v2619
    %2642 = vmatprep.subr.bf16.mxu0 0
    %2643 = vmatpush1.bf16.msra.mxu0 %v2620
    %2644 = vmatprep.subr.bf16.mxu0 0
    %2645 = vmatpush1.bf16.msra.mxu0 %v2621
    %2646 = vmatprep.subr.bf16.mxu0 0
    %2647 = vmatpush1.bf16.msra.mxu0 0
    %2648 = vmatprep.subr.bf16.mxu0 0
    %2649 = vmatpush1.bf16.msra.mxu0 0
    %2650 = vmatprep.subr.bf16.mxu0 0
    %2651 = vmatpush1.bf16.msra.mxu0 0
    %2652 = vmatprep.subr.bf16.mxu0 0
    %2653 = vmatpush1.bf16.msra.mxu0 0
    %2654 = vmatprep.subr.bf16.mxu0 0
    %2655 = vmatpush1.bf16.msra.mxu0 0
    %2656 = vmatprep.subr.bf16.mxu0 0
    %2657 = vmatpush1.bf16.msra.mxu0 0
    %2658 = vmatprep.subr.bf16.mxu0 0
    %2659 = vmatpush1.bf16.msra.mxu0 0
    %2660 = vmatprep.subr.bf16.mxu0 0
    %2661 = vmatpush1.bf16.msra.mxu0 0
    %2662 = vmatprep.mubr.bf16.mxu0 0
    %2663 = vmatmul.mubr.bf16.gmra.mrb[0].mxu0 %v2558
    %v2664 = vpop.f32.mrb[0].mxu0
    %v2665 = vadd.f32 %v2580, %v2664
    %v2666 = vpop.f32.mrb[0].mxu0
    %v2667 = vpop.f32.mrb[0].mxu0
    %v2668 = vpop.f32.mrb[0].mxu0
    %2669 = vdwg.mxu0
    %2670 = vst [vmem:[#allocation10] sm:$0xff] %v2665
    // Predicated region
    $region30: #{tpu_custom_call.1} parent=1 // pred_check
      _
    $region31: #{tpu_custom_call.1} parent=1 // pred_check_branch
      %2672 = sbr.rel (0) target = $region33
    $region32: #{tpu_custom_call.1} parent=1 // pred_region
      %s2674 = ssub.s32 128, 128
      %2675 = vsyncadd [#allocation6], %s2674
      %s2677 = sshll.u32 [#allocation10], 4
      %s2678 = int_to_ptr.vmem [resolvable:$true] %s2677
      %2680 = dma.vmem_to_hbm [thread:$0]  %s2678, 128, %s4, [#allocation6]
    $region33: #{tpu_custom_call.1} parent=1 // pred_fallthru
      _
    // Predicated region
    $region34: #{tpu_custom_call.1} parent=1 // pred_check
      _
    $region35: #{tpu_custom_call.1} parent=1 // pred_check_branch
      %2682 = sbr.rel (0) target = $region37
    $region36: #{tpu_custom_call.1} parent=1 // pred_region
      %2683 = dma.done [#allocation6], 128
    $region37: #{tpu_custom_call.1} parent=1 // pred_fallthru
      _
    %2684 = vsyncpa [#allocation5], 1
    %2685 = vsyncpa [#allocation8], 1
    %2686 = vsyncpa [#allocation6], 1

</llo_original>
